<compile_context>
chip_gen: v5e
topology: v5e:2x2
jax: 0.10.0
libtpu: 0.0.40
codegen_flags: <defaults>
</compile_context>

<pallas_src>
import functools

import jax
import jax.numpy as jnp
from jax.experimental import pallas as pl
from jax.experimental.pallas import tpu as pltpu

EPS = 1e-5

# Single-big-matmul im2col path (best on v6e/v7x, where K=9*C should approach the
# 256-wide MXU at real channel counts).  Set False for the slab-free per-tap
# accumulate variant -- the biggest relative win on v5e.
USE_IM2COL = True

_TAPS = tuple((oy, ox) for oy in (-1, 0, 1) for ox in (-1, 0, 1))


def _residual_block_kernel(W, use_im2col,
                           x_ref, mask_ref, ones_ref,
                           w1_ref, g1_ref, be1_ref,
                           w2_ref, g2_ref, be2_ref,
                           o_ref, *scratch):
    # x_ref:    (Cp, N2) f32    activations: channels on sublanes, B*H*W on lanes
    # mask_ref: (9*Cp, N2) f32  per-tap boundary masks, pre-broadcast on the host
    # ones_ref: (N2, 1) f32     ones column: BN moments become MXU matmuls
    # w*_ref:   im2col: (Cp, 9*Cp) bf16, column (ky*3+kx)*Cp + ci
    #           per-tap: (9, Cp, Cp) bf16
    # g*/be*:   (Cp, 1) f32     BN gamma / beta (zero in padded channel rows)
    # o_ref:    (Cp, N2) f32
    # scratch:  im2col only: (9*Cp, N2) bf16 slab
    Cp, N2 = x_ref.shape
    inv_n = 1.0 / N2
    col_ref = scratch[0] if scratch else None
    ones_col = ones_ref[...]

    def masked_taps(act):
        # 8 XLU rolls per conv: two row shifts (+-W), then +-1 column shifts of the
        # three row-aligned copies.  Boundary masks (image-row / batch wrap-around)
        # were precomputed on the host, so there is no in-kernel compare/AND work.
        rows = {-1: pltpu.roll(act, shift=W, axis=1),         # needs row y-1
                0: act,
                1: pltpu.roll(act, shift=N2 - W, axis=1)}     # needs row y+1
        for t, (oy, ox) in enumerate(_TAPS):
            base = rows[oy]
            if ox == 0:
                tap = base
            else:
                tap = pltpu.roll(base, shift=(1 if ox < 0 else N2 - 1), axis=1)
            if oy == 0 and ox == 0:
                yield t, tap                                   # centre tap: all-ones mask
            else:
                yield t, tap * mask_ref[t * Cp:(t + 1) * Cp, :]

    def conv3x3(act, w_ref):
        if use_im2col:
            # bf16 im2col slab: 9 full, aligned (Cp, N2) tile-block stores, then a
            # single MXU matmul (Cp, 9*Cp) @ (9*Cp, N2) with f32 accumulation.
            for t, tap in masked_taps(act):
                col_ref[t * Cp:(t + 1) * Cp, :] = tap.astype(jnp.bfloat16)
            return jnp.dot(w_ref[...], col_ref[...],
                           preferred_element_type=jnp.float32)
        # Slab-free variant (v5e friendly): accumulate 9 small bf16 matmuls in f32,
        # no im2col stores / slab read-back.
        acc = None
        for t, tap in masked_taps(act):
            part = jnp.dot(w_ref[t], tap.astype(jnp.bfloat16),
                           preferred_element_type=jnp.float32)
            acc = part if acc is None else acc + part
        return acc

    def batchnorm(y, g, be):
        # Training-mode BatchNorm2d (batch mean / biased variance over N,H,W).
        # Lane-axis moment reductions run on the MXU (dots against a ones column)
        # instead of the XLU, which already carries the tap rolls.  All f32.
        s1 = jnp.dot(y, ones_col, preferred_element_type=jnp.float32)
        s2 = jnp.dot(y * y, ones_col, preferred_element_type=jnp.float32)
        mean = s1 * inv_n
        var = s2 * inv_n - mean * mean
        scale = g * jax.lax.rsqrt(var + EPS)
        return y * scale + (be - mean * scale)

    xv = x_ref[...]                               # identity / conv1 input (f32)

    out = batchnorm(conv3x3(xv, w1_ref), g1_ref[...], be1_ref[...])
    out = jnp.maximum(out, 0.0)                   # ReLU
    out = batchnorm(conv3x3(out, w2_ref), g2_ref[...], be2_ref[...])

    o_ref[...] = jnp.maximum(out + xv, 0.0).astype(o_ref.dtype)


def residual_block(x_nchw, params, *, use_im2col=USE_IM2COL):
    """Applies the residual block. x_nchw: (B, C, H, W) float32."""
    B, C, H, W = x_nchw.shape
    N2 = B * H * W
    # Pad channels to 16 so every bf16 tap block is a full (16,128) packed tile.
    Cp = max(16, -(-C // 16) * 16)

    # NCHW -> lane-dense (C, B*H*W).  At production scale keep this layout between
    # residual blocks (the transposes are full HBM round trips) and pre-convert
    # the weights / masks once outside the hot path.
    x2d = jnp.transpose(x_nchw, (1, 0, 2, 3)).reshape(C, N2)
    x_pad = jnp.zeros((Cp, N2), jnp.float32).at[:C, :].set(x2d)

    # Per-tap boundary masks, pre-broadcast to Cp sublanes: the kernel does one
    # aligned load + multiply per tap and needs no int coordinates at all.
    n = jnp.arange(N2, dtype=jnp.int32)
    xi = n % W
    yi = (n // W) % H
    rows = []
    for oy, ox in _TAPS:
        ok = (xi + ox >= 0) & (xi + ox < W) & (yi + oy >= 0) & (yi + oy < H)
        rows.append(ok.astype(jnp.float32))
    mask = jnp.broadcast_to(jnp.stack(rows)[:, None, :], (9, Cp, N2)).reshape(9 * Cp, N2)

    ones_col = jnp.ones((N2, 1), jnp.float32)     # BN moments via MXU

    def prep_w(w_hwio):
        # HWIO (3,3,C,C) -> bf16 MXU operand with zero-padded channels.
        wt = jnp.transpose(w_hwio, (3, 0, 1, 2))              # (co, ky, kx, ci)
        wp = jnp.zeros((Cp, 3, 3, Cp), jnp.float32).at[:C, :, :, :C].set(wt)
        if use_im2col:
            return wp.reshape(Cp, 9 * Cp).astype(jnp.bfloat16)            # (Cp, 9*Cp)
        return jnp.transpose(wp, (1, 2, 0, 3)).reshape(9, Cp, Cp).astype(jnp.bfloat16)

    def prep_c(v):
        return jnp.zeros((Cp, 1), jnp.float32).at[:C, 0].set(v.reshape(C))

    # NOTE: conv biases b1/b2 are intentionally NOT passed -- training-mode BN
    # subtracts the batch mean, which cancels them exactly.
    kernel = functools.partial(_residual_block_kernel, W, use_im2col)
    vmem = pl.BlockSpec(memory_space=pltpu.MemorySpace.VMEM)
    scratch = [pltpu.VMEM((9 * Cp, N2), jnp.bfloat16)] if use_im2col else []

    cost = pl.CostEstimate(
        flops=2 * (2 * Cp * 9 * Cp * N2) + 4 * (2 * Cp * N2),   # 2 convs + 4 BN moment dots
        transcendentals=2 * Cp,                                  # rsqrt per BN channel
        bytes_accessed=4 * (x_pad.size + mask.size + ones_col.size + Cp * N2)
                       + 2 * (2 * Cp * 9 * Cp))

    # Scale-up note (real ResNet shapes): add a grid over (batch, row-tiles) with
    # dimension_semantics=("parallel", ...) so v7x can shard across its 2 TCs; size
    # N_tile so the bf16 im2col slab (9x the activation tile) plus double-buffered
    # in/out tiles fit per-chip VMEM (64 MiB v7x, 128 MiB v6e/v5e); keep weights /
    # BN params resident via constant index_maps (default Buffered(2) on activation
    # tiles); add halo handling for the row taps (in-tile rolls no longer see
    # neighbouring rows); and split BN into a stats pass + normalize pass (or
    # accumulate stats over an "arbitrary" axis with pl.when init/finalize) so the
    # batch statistics stay global.  At this toy size a single program is optimal.
    out2d = pl.pallas_call(
        kernel,
        out_shape=jax.ShapeDtypeStruct((Cp, N2), jnp.float32),
        in_specs=[vmem] * 9,
        out_specs=vmem,
        scratch_shapes=scratch,
        cost_estimate=cost,
        compiler_params=pltpu.CompilerParams(vmem_limit_bytes=32 * 1024 * 1024),
    )(x_pad, mask, ones_col,
      prep_w(params["w1"]), prep_c(params["g1"]), prep_c(params["be1"]),
      prep_w(params["w2"]), prep_c(params["g2"]), prep_c(params["be2"]))

    out = out2d[:C, :].reshape(C, B, H, W)
    return jnp.transpose(out, (1, 0, 2, 3))       # -> NCHW


def residual_block_reference(x_nchw, params):
    """Pure-JAX f32 reference matching the PyTorch forward (training-mode BN, with biases)."""
    x = jnp.transpose(x_nchw, (0, 2, 3, 1))

    def conv(y, w, b):
        out = jax.lax.conv_general_dilated(
            y, w, window_strides=(1, 1), padding="SAME",
            dimension_numbers=("NHWC", "HWIO", "NHWC"))
        return out + b

    def bn(y, g, be):
        mean = jnp.mean(y, axis=(0, 1, 2), keepdims=True)
        var = jnp.mean((y - mean) ** 2, axis=(0, 1, 2), keepdims=True)
        return (y - mean) * jax.lax.rsqrt(var + EPS) * g + be

    out = jax.nn.relu(bn(conv(x, params["w1"], params["b1"]),
                         params["g1"], params["be1"]))
    out = bn(conv(out, params["w2"], params["b2"]), params["g2"], params["be2"])
    out = jax.nn.relu(out + x)
    return jnp.transpose(out, (0, 3, 1, 2))


def make_params(key, channels):
    """Deterministic synthetic parameters (PyTorch conv init ranges, BN defaults)."""
    kw1, kb1, kw2, kb2 = jax.random.split(key, 4)
    fan_in = channels * 3 * 3
    bound = float(1.0 / (fan_in ** 0.5))
    u = lambda k, shape: jax.random.uniform(k, shape, jnp.float32, -bound, bound)
    return dict(
        w1=u(kw1, (3, 3, channels, channels)),   # HWIO
        b1=u(kb1, (1, channels)),
        g1=jnp.ones((1, channels), jnp.float32),
        be1=jnp.zeros((1, channels), jnp.float32),
        w2=u(kw2, (3, 3, channels, channels)),
        b2=u(kb2, (1, channels)),
        g2=jnp.ones((1, channels), jnp.float32),
        be2=jnp.zeros((1, channels), jnp.float32),
    )


if __name__ == "__main__":
    B, C, H, W = 2, 4, 16, 16
    key = jax.random.PRNGKey(0)
    kx, kp = jax.random.split(key)
    x = jax.random.normal(kx, (B, C, H, W), jnp.float32)
    params = make_params(kp, C)

    y = jax.block_until_ready(residual_block(x, params))
    y_ref = jax.block_until_ready(residual_block_reference(x, params))

    assert y.shape == (B, C, H, W), y.shape
    max_err = float(jnp.max(jnp.abs(y - y_ref)))
    # Tolerance sized for bf16 MXU operands (conv weights + im2col slab); all
    # accumulation and BN / elementwise math remain f32.
    assert jnp.allclose(y, y_ref, atol=5e-2, rtol=5e-2), max_err
    print("KERNEL_OK")
</pallas_src>

<mosaic_0001>
module attributes {stable_mosaic.version = 11 : i64} {
  func.func @_residual_block_kernel(%arg0: memref<16x512xf32, #tpu.memory_space<vmem>>, %arg1: memref<144x512xf32, #tpu.memory_space<vmem>>, %arg2: memref<512x1xf32, #tpu.memory_space<vmem>>, %arg3: memref<16x144xbf16, #tpu.memory_space<vmem>>, %arg4: memref<16x1xf32, #tpu.memory_space<vmem>>, %arg5: memref<16x1xf32, #tpu.memory_space<vmem>>, %arg6: memref<16x144xbf16, #tpu.memory_space<vmem>>, %arg7: memref<16x1xf32, #tpu.memory_space<vmem>>, %arg8: memref<16x1xf32, #tpu.memory_space<vmem>>, %arg9: memref<16x512xf32, #tpu.memory_space<vmem>>, %arg10: memref<144x512xbf16, #tpu.memory_space<vmem>>) attributes {dimension_semantics = [], scalar_prefetch = 0 : i64, scratch_operands = 1 : i64, tpu.core_type = #tpu.core_type<tc>} {
    %c0 = arith.constant 0 : index
    %c0_0 = arith.constant 0 : index
    %0 = vector.load %arg2[%c0, %c0_0] : memref<512x1xf32, #tpu.memory_space<vmem>>, vector<512x1xf32>
    %c0_1 = arith.constant 0 : index
    %c0_2 = arith.constant 0 : index
    %1 = vector.load %arg0[%c0_1, %c0_2] : memref<16x512xf32, #tpu.memory_space<vmem>>, vector<16x512xf32>
    %c16_i32 = arith.constant 16 : i32
    %2 = tpu.dynamic_rotate %1 by %c16_i32 dim 1 : vector<16x512xf32>, i32 -> vector<16x512xf32>
    %c496_i32 = arith.constant 496 : i32
    %3 = tpu.dynamic_rotate %1 by %c496_i32 dim 1 : vector<16x512xf32>, i32 -> vector<16x512xf32>
    %c1_i32 = arith.constant 1 : i32
    %4 = tpu.dynamic_rotate %2 by %c1_i32 dim 1 : vector<16x512xf32>, i32 -> vector<16x512xf32>
    %c0_3 = arith.constant 0 : index
    %c0_4 = arith.constant 0 : index
    %5 = vector.load %arg1[%c0_3, %c0_4] : memref<144x512xf32, #tpu.memory_space<vmem>>, vector<16x512xf32>
    %6 = arith.mulf %4, %5 : vector<16x512xf32>
    %7 = arith.truncf %6 : vector<16x512xf32> to vector<16x512xbf16>
    %c0_5 = arith.constant 0 : index
    %c0_6 = arith.constant 0 : index
    %8 = vector.load %arg10[%c0_5, %c0_6] : memref<144x512xbf16, #tpu.memory_space<vmem>>, vector<16x512xbf16>
    tpu.vector_store %arg10[%c0_5, %c0_6], %7 {strides = array<i32>} : memref<144x512xbf16, #tpu.memory_space<vmem>>, vector<16x512xbf16>,
    %c16 = arith.constant 16 : index
    %c0_7 = arith.constant 0 : index
    %9 = vector.load %arg1[%c16, %c0_7] : memref<144x512xf32, #tpu.memory_space<vmem>>, vector<16x512xf32>
    %10 = arith.mulf %2, %9 : vector<16x512xf32>
    %11 = arith.truncf %10 : vector<16x512xf32> to vector<16x512xbf16>
    %c16_8 = arith.constant 16 : index
    %c0_9 = arith.constant 0 : index
    %12 = vector.load %arg10[%c16_8, %c0_9] : memref<144x512xbf16, #tpu.memory_space<vmem>>, vector<16x512xbf16>
    tpu.vector_store %arg10[%c16_8, %c0_9], %11 {strides = array<i32>} : memref<144x512xbf16, #tpu.memory_space<vmem>>, vector<16x512xbf16>,
    %c511_i32 = arith.constant 511 : i32
    %13 = tpu.dynamic_rotate %2 by %c511_i32 dim 1 : vector<16x512xf32>, i32 -> vector<16x512xf32>
    %c32 = arith.constant 32 : index
    %c0_10 = arith.constant 0 : index
    %14 = vector.load %arg1[%c32, %c0_10] : memref<144x512xf32, #tpu.memory_space<vmem>>, vector<16x512xf32>
    %15 = arith.mulf %13, %14 : vector<16x512xf32>
    %16 = arith.truncf %15 : vector<16x512xf32> to vector<16x512xbf16>
    %c32_11 = arith.constant 32 : index
    %c0_12 = arith.constant 0 : index
    %17 = vector.load %arg10[%c32_11, %c0_12] : memref<144x512xbf16, #tpu.memory_space<vmem>>, vector<16x512xbf16>
    tpu.vector_store %arg10[%c32_11, %c0_12], %16 {strides = array<i32>} : memref<144x512xbf16, #tpu.memory_space<vmem>>, vector<16x512xbf16>,
    %c1_i32_13 = arith.constant 1 : i32
    %18 = tpu.dynamic_rotate %1 by %c1_i32_13 dim 1 : vector<16x512xf32>, i32 -> vector<16x512xf32>
    %c48 = arith.constant 48 : index
    %c0_14 = arith.constant 0 : index
    %19 = vector.load %arg1[%c48, %c0_14] : memref<144x512xf32, #tpu.memory_space<vmem>>, vector<16x512xf32>
    %20 = arith.mulf %18, %19 : vector<16x512xf32>
    %21 = arith.truncf %20 : vector<16x512xf32> to vector<16x512xbf16>
    %c48_15 = arith.constant 48 : index
    %c0_16 = arith.constant 0 : index
    %22 = vector.load %arg10[%c48_15, %c0_16] : memref<144x512xbf16, #tpu.memory_space<vmem>>, vector<16x512xbf16>
    tpu.vector_store %arg10[%c48_15, %c0_16], %21 {strides = array<i32>} : memref<144x512xbf16, #tpu.memory_space<vmem>>, vector<16x512xbf16>,
    %23 = arith.truncf %1 : vector<16x512xf32> to vector<16x512xbf16>
    %c64 = arith.constant 64 : index
    %c0_17 = arith.constant 0 : index
    %24 = vector.load %arg10[%c64, %c0_17] : memref<144x512xbf16, #tpu.memory_space<vmem>>, vector<16x512xbf16>
    tpu.vector_store %arg10[%c64, %c0_17], %23 {strides = array<i32>} : memref<144x512xbf16, #tpu.memory_space<vmem>>, vector<16x512xbf16>,
    %c511_i32_18 = arith.constant 511 : i32
    %25 = tpu.dynamic_rotate %1 by %c511_i32_18 dim 1 : vector<16x512xf32>, i32 -> vector<16x512xf32>
    %c80 = arith.constant 80 : index
    %c0_19 = arith.constant 0 : index
    %26 = vector.load %arg1[%c80, %c0_19] : memref<144x512xf32, #tpu.memory_space<vmem>>, vector<16x512xf32>
    %27 = arith.mulf %25, %26 : vector<16x512xf32>
    %28 = arith.truncf %27 : vector<16x512xf32> to vector<16x512xbf16>
    %c80_20 = arith.constant 80 : index
    %c0_21 = arith.constant 0 : index
    %29 = vector.load %arg10[%c80_20, %c0_21] : memref<144x512xbf16, #tpu.memory_space<vmem>>, vector<16x512xbf16>
    tpu.vector_store %arg10[%c80_20, %c0_21], %28 {strides = array<i32>} : memref<144x512xbf16, #tpu.memory_space<vmem>>, vector<16x512xbf16>,
    %c1_i32_22 = arith.constant 1 : i32
    %30 = tpu.dynamic_rotate %3 by %c1_i32_22 dim 1 : vector<16x512xf32>, i32 -> vector<16x512xf32>
    %c96 = arith.constant 96 : index
    %c0_23 = arith.constant 0 : index
    %31 = vector.load %arg1[%c96, %c0_23] : memref<144x512xf32, #tpu.memory_space<vmem>>, vector<16x512xf32>
    %32 = arith.mulf %30, %31 : vector<16x512xf32>
    %33 = arith.truncf %32 : vector<16x512xf32> to vector<16x512xbf16>
    %c96_24 = arith.constant 96 : index
    %c0_25 = arith.constant 0 : index
    %34 = vector.load %arg10[%c96_24, %c0_25] : memref<144x512xbf16, #tpu.memory_space<vmem>>, vector<16x512xbf16>
    tpu.vector_store %arg10[%c96_24, %c0_25], %33 {strides = array<i32>} : memref<144x512xbf16, #tpu.memory_space<vmem>>, vector<16x512xbf16>,
    %c112 = arith.constant 112 : index
    %c0_26 = arith.constant 0 : index
    %35 = vector.load %arg1[%c112, %c0_26] : memref<144x512xf32, #tpu.memory_space<vmem>>, vector<16x512xf32>
    %36 = arith.mulf %3, %35 : vector<16x512xf32>
    %37 = arith.truncf %36 : vector<16x512xf32> to vector<16x512xbf16>
    %c112_27 = arith.constant 112 : index
    %c0_28 = arith.constant 0 : index
    %38 = vector.load %arg10[%c112_27, %c0_28] : memref<144x512xbf16, #tpu.memory_space<vmem>>, vector<16x512xbf16>
    tpu.vector_store %arg10[%c112_27, %c0_28], %37 {strides = array<i32>} : memref<144x512xbf16, #tpu.memory_space<vmem>>, vector<16x512xbf16>,
    %c511_i32_29 = arith.constant 511 : i32
    %39 = tpu.dynamic_rotate %3 by %c511_i32_29 dim 1 : vector<16x512xf32>, i32 -> vector<16x512xf32>
    %c128 = arith.constant 128 : index
    %c0_30 = arith.constant 0 : index
    %40 = vector.load %arg1[%c128, %c0_30] : memref<144x512xf32, #tpu.memory_space<vmem>>, vector<16x512xf32>
    %41 = arith.mulf %39, %40 : vector<16x512xf32>
    %42 = arith.truncf %41 : vector<16x512xf32> to vector<16x512xbf16>
    %c128_31 = arith.constant 128 : index
    %c0_32 = arith.constant 0 : index
    %43 = vector.load %arg10[%c128_31, %c0_32] : memref<144x512xbf16, #tpu.memory_space<vmem>>, vector<16x512xbf16>
    tpu.vector_store %arg10[%c128_31, %c0_32], %42 {strides = array<i32>} : memref<144x512xbf16, #tpu.memory_space<vmem>>, vector<16x512xbf16>,
    %c0_33 = arith.constant 0 : index
    %c0_34 = arith.constant 0 : index
    %44 = vector.load %arg3[%c0_33, %c0_34] : memref<16x144xbf16, #tpu.memory_space<vmem>>, vector<16x144xbf16>
    %c0_35 = arith.constant 0 : index
    %c0_36 = arith.constant 0 : index
    %45 = vector.load %arg10[%c0_35, %c0_36] : memref<144x512xbf16, #tpu.memory_space<vmem>>, vector<144x512xbf16>
    %cst = arith.constant dense<0.000000e+00> : vector<16x512xf32>
    %46 = tpu.matmul %44, %45, %cst {dimension_numbers = #tpu.dot_dimension_numbers<[1], [0], [0], [1], [0, 0, 1, 1], [], []>} : vector<16x144xbf16>, vector<144x512xbf16>, vector<16x512xf32> -> vector<16x512xf32>
    %c0_37 = arith.constant 0 : index
    %c0_38 = arith.constant 0 : index
    %47 = vector.load %arg4[%c0_37, %c0_38] : memref<16x1xf32, #tpu.memory_space<vmem>>, vector<16x1xf32>
    %c0_39 = arith.constant 0 : index
    %c0_40 = arith.constant 0 : index
    %48 = vector.load %arg5[%c0_39, %c0_40] : memref<16x1xf32, #tpu.memory_space<vmem>>, vector<16x1xf32>
    %cst_41 = arith.constant dense<0.000000e+00> : vector<16x1xf32>
    %49 = tpu.matmul %46, %0, %cst_41 {dimension_numbers = #tpu.dot_dimension_numbers<[1], [0], [0], [1], [0, 0, 1, 1], [], []>} : vector<16x512xf32>, vector<512x1xf32>, vector<16x1xf32> -> vector<16x1xf32>
    %50 = arith.mulf %46, %46 : vector<16x512xf32>
    %cst_42 = arith.constant dense<0.000000e+00> : vector<16x1xf32>
    %51 = tpu.matmul %50, %0, %cst_42 {dimension_numbers = #tpu.dot_dimension_numbers<[1], [0], [0], [1], [0, 0, 1, 1], [], []>} : vector<16x512xf32>, vector<512x1xf32>, vector<16x1xf32> -> vector<16x1xf32>
    %cst_43 = arith.constant 0.001953125 : f32
    %52 = vector.broadcast %cst_43 : f32 to vector<16x1xf32>
    %53 = arith.mulf %49, %52 : vector<16x1xf32>
    %cst_44 = arith.constant 0.001953125 : f32
    %54 = vector.broadcast %cst_44 : f32 to vector<16x1xf32>
    %55 = arith.mulf %51, %54 : vector<16x1xf32>
    %56 = arith.mulf %53, %53 : vector<16x1xf32>
    %57 = arith.subf %55, %56 : vector<16x1xf32>
    %cst_45 = arith.constant 9.99999974E-6 : f32
    %58 = vector.broadcast %cst_45 : f32 to vector<16x1xf32>
    %59 = arith.addf %57, %58 : vector<16x1xf32>
    %60 = math.rsqrt %59 : vector<16x1xf32>
    %61 = arith.mulf %47, %60 : vector<16x1xf32>
    %62 = vector.broadcast %61 : vector<16x1xf32> to vector<16x512xf32>
    %63 = arith.mulf %46, %62 : vector<16x512xf32>
    %64 = arith.mulf %53, %61 : vector<16x1xf32>
    %65 = arith.subf %48, %64 : vector<16x1xf32>
    %66 = vector.broadcast %65 : vector<16x1xf32> to vector<16x512xf32>
    %67 = arith.addf %63, %66 : vector<16x512xf32>
    %cst_46 = arith.constant 0.000000e+00 : f32
    %68 = vector.broadcast %cst_46 : f32 to vector<16x512xf32>
    %69 = arith.maximumf %67, %68 : vector<16x512xf32>
    %c16_i32_47 = arith.constant 16 : i32
    %70 = tpu.dynamic_rotate %69 by %c16_i32_47 dim 1 : vector<16x512xf32>, i32 -> vector<16x512xf32>
    %c496_i32_48 = arith.constant 496 : i32
    %71 = tpu.dynamic_rotate %69 by %c496_i32_48 dim 1 : vector<16x512xf32>, i32 -> vector<16x512xf32>
    %c1_i32_49 = arith.constant 1 : i32
    %72 = tpu.dynamic_rotate %70 by %c1_i32_49 dim 1 : vector<16x512xf32>, i32 -> vector<16x512xf32>
    %c0_50 = arith.constant 0 : index
    %c0_51 = arith.constant 0 : index
    %73 = vector.load %arg1[%c0_50, %c0_51] : memref<144x512xf32, #tpu.memory_space<vmem>>, vector<16x512xf32>
    %74 = arith.mulf %72, %73 : vector<16x512xf32>
    %75 = arith.truncf %74 : vector<16x512xf32> to vector<16x512xbf16>
    %c0_52 = arith.constant 0 : index
    %c0_53 = arith.constant 0 : index
    %76 = vector.load %arg10[%c0_52, %c0_53] : memref<144x512xbf16, #tpu.memory_space<vmem>>, vector<16x512xbf16>
    tpu.vector_store %arg10[%c0_52, %c0_53], %75 {strides = array<i32>} : memref<144x512xbf16, #tpu.memory_space<vmem>>, vector<16x512xbf16>,
    %c16_54 = arith.constant 16 : index
    %c0_55 = arith.constant 0 : index
    %77 = vector.load %arg1[%c16_54, %c0_55] : memref<144x512xf32, #tpu.memory_space<vmem>>, vector<16x512xf32>
    %78 = arith.mulf %70, %77 : vector<16x512xf32>
    %79 = arith.truncf %78 : vector<16x512xf32> to vector<16x512xbf16>
    %c16_56 = arith.constant 16 : index
    %c0_57 = arith.constant 0 : index
    %80 = vector.load %arg10[%c16_56, %c0_57] : memref<144x512xbf16, #tpu.memory_space<vmem>>, vector<16x512xbf16>
    tpu.vector_store %arg10[%c16_56, %c0_57], %79 {strides = array<i32>} : memref<144x512xbf16, #tpu.memory_space<vmem>>, vector<16x512xbf16>,
    %c511_i32_58 = arith.constant 511 : i32
    %81 = tpu.dynamic_rotate %70 by %c511_i32_58 dim 1 : vector<16x512xf32>, i32 -> vector<16x512xf32>
    %c32_59 = arith.constant 32 : index
    %c0_60 = arith.constant 0 : index
    %82 = vector.load %arg1[%c32_59, %c0_60] : memref<144x512xf32, #tpu.memory_space<vmem>>, vector<16x512xf32>
    %83 = arith.mulf %81, %82 : vector<16x512xf32>
    %84 = arith.truncf %83 : vector<16x512xf32> to vector<16x512xbf16>
    %c32_61 = arith.constant 32 : index
    %c0_62 = arith.constant 0 : index
    %85 = vector.load %arg10[%c32_61, %c0_62] : memref<144x512xbf16, #tpu.memory_space<vmem>>, vector<16x512xbf16>
    tpu.vector_store %arg10[%c32_61, %c0_62], %84 {strides = array<i32>} : memref<144x512xbf16, #tpu.memory_space<vmem>>, vector<16x512xbf16>,
    %c1_i32_63 = arith.constant 1 : i32
    %86 = tpu.dynamic_rotate %69 by %c1_i32_63 dim 1 : vector<16x512xf32>, i32 -> vector<16x512xf32>
    %c48_64 = arith.constant 48 : index
    %c0_65 = arith.constant 0 : index
    %87 = vector.load %arg1[%c48_64, %c0_65] : memref<144x512xf32, #tpu.memory_space<vmem>>, vector<16x512xf32>
    %88 = arith.mulf %86, %87 : vector<16x512xf32>
    %89 = arith.truncf %88 : vector<16x512xf32> to vector<16x512xbf16>
    %c48_66 = arith.constant 48 : index
    %c0_67 = arith.constant 0 : index
    %90 = vector.load %arg10[%c48_66, %c0_67] : memref<144x512xbf16, #tpu.memory_space<vmem>>, vector<16x512xbf16>
    tpu.vector_store %arg10[%c48_66, %c0_67], %89 {strides = array<i32>} : memref<144x512xbf16, #tpu.memory_space<vmem>>, vector<16x512xbf16>,
    %91 = arith.truncf %69 : vector<16x512xf32> to vector<16x512xbf16>
    %c64_68 = arith.constant 64 : index
    %c0_69 = arith.constant 0 : index
    %92 = vector.load %arg10[%c64_68, %c0_69] : memref<144x512xbf16, #tpu.memory_space<vmem>>, vector<16x512xbf16>
    tpu.vector_store %arg10[%c64_68, %c0_69], %91 {strides = array<i32>} : memref<144x512xbf16, #tpu.memory_space<vmem>>, vector<16x512xbf16>,
    %c511_i32_70 = arith.constant 511 : i32
    %93 = tpu.dynamic_rotate %69 by %c511_i32_70 dim 1 : vector<16x512xf32>, i32 -> vector<16x512xf32>
    %c80_71 = arith.constant 80 : index
    %c0_72 = arith.constant 0 : index
    %94 = vector.load %arg1[%c80_71, %c0_72] : memref<144x512xf32, #tpu.memory_space<vmem>>, vector<16x512xf32>
    %95 = arith.mulf %93, %94 : vector<16x512xf32>
    %96 = arith.truncf %95 : vector<16x512xf32> to vector<16x512xbf16>
    %c80_73 = arith.constant 80 : index
    %c0_74 = arith.constant 0 : index
    %97 = vector.load %arg10[%c80_73, %c0_74] : memref<144x512xbf16, #tpu.memory_space<vmem>>, vector<16x512xbf16>
    tpu.vector_store %arg10[%c80_73, %c0_74], %96 {strides = array<i32>} : memref<144x512xbf16, #tpu.memory_space<vmem>>, vector<16x512xbf16>,
    %c1_i32_75 = arith.constant 1 : i32
    %98 = tpu.dynamic_rotate %71 by %c1_i32_75 dim 1 : vector<16x512xf32>, i32 -> vector<16x512xf32>
    %c96_76 = arith.constant 96 : index
    %c0_77 = arith.constant 0 : index
    %99 = vector.load %arg1[%c96_76, %c0_77] : memref<144x512xf32, #tpu.memory_space<vmem>>, vector<16x512xf32>
    %100 = arith.mulf %98, %99 : vector<16x512xf32>
    %101 = arith.truncf %100 : vector<16x512xf32> to vector<16x512xbf16>
    %c96_78 = arith.constant 96 : index
    %c0_79 = arith.constant 0 : index
    %102 = vector.load %arg10[%c96_78, %c0_79] : memref<144x512xbf16, #tpu.memory_space<vmem>>, vector<16x512xbf16>
    tpu.vector_store %arg10[%c96_78, %c0_79], %101 {strides = array<i32>} : memref<144x512xbf16, #tpu.memory_space<vmem>>, vector<16x512xbf16>,
    %c112_80 = arith.constant 112 : index
    %c0_81 = arith.constant 0 : index
    %103 = vector.load %arg1[%c112_80, %c0_81] : memref<144x512xf32, #tpu.memory_space<vmem>>, vector<16x512xf32>
    %104 = arith.mulf %71, %103 : vector<16x512xf32>
    %105 = arith.truncf %104 : vector<16x512xf32> to vector<16x512xbf16>
    %c112_82 = arith.constant 112 : index
    %c0_83 = arith.constant 0 : index
    %106 = vector.load %arg10[%c112_82, %c0_83] : memref<144x512xbf16, #tpu.memory_space<vmem>>, vector<16x512xbf16>
    tpu.vector_store %arg10[%c112_82, %c0_83], %105 {strides = array<i32>} : memref<144x512xbf16, #tpu.memory_space<vmem>>, vector<16x512xbf16>,
    %c511_i32_84 = arith.constant 511 : i32
    %107 = tpu.dynamic_rotate %71 by %c511_i32_84 dim 1 : vector<16x512xf32>, i32 -> vector<16x512xf32>
    %c128_85 = arith.constant 128 : index
    %c0_86 = arith.constant 0 : index
    %108 = vector.load %arg1[%c128_85, %c0_86] : memref<144x512xf32, #tpu.memory_space<vmem>>, vector<16x512xf32>
    %109 = arith.mulf %107, %108 : vector<16x512xf32>
    %110 = arith.truncf %109 : vector<16x512xf32> to vector<16x512xbf16>
    %c128_87 = arith.constant 128 : index
    %c0_88 = arith.constant 0 : index
    %111 = vector.load %arg10[%c128_87, %c0_88] : memref<144x512xbf16, #tpu.memory_space<vmem>>, vector<16x512xbf16>
    tpu.vector_store %arg10[%c128_87, %c0_88], %110 {strides = array<i32>} : memref<144x512xbf16, #tpu.memory_space<vmem>>, vector<16x512xbf16>,
    %c0_89 = arith.constant 0 : index
    %c0_90 = arith.constant 0 : index
    %112 = vector.load %arg6[%c0_89, %c0_90] : memref<16x144xbf16, #tpu.memory_space<vmem>>, vector<16x144xbf16>
    %c0_91 = arith.constant 0 : index
    %c0_92 = arith.constant 0 : index
    %113 = vector.load %arg10[%c0_91, %c0_92] : memref<144x512xbf16, #tpu.memory_space<vmem>>, vector<144x512xbf16>
    %cst_93 = arith.constant dense<0.000000e+00> : vector<16x512xf32>
    %114 = tpu.matmul %112, %113, %cst_93 {dimension_numbers = #tpu.dot_dimension_numbers<[1], [0], [0], [1], [0, 0, 1, 1], [], []>} : vector<16x144xbf16>, vector<144x512xbf16>, vector<16x512xf32> -> vector<16x512xf32>
    %c0_94 = arith.constant 0 : index
    %c0_95 = arith.constant 0 : index
    %115 = vector.load %arg7[%c0_94, %c0_95] : memref<16x1xf32, #tpu.memory_space<vmem>>, vector<16x1xf32>
    %c0_96 = arith.constant 0 : index
    %c0_97 = arith.constant 0 : index
    %116 = vector.load %arg8[%c0_96, %c0_97] : memref<16x1xf32, #tpu.memory_space<vmem>>, vector<16x1xf32>
    %cst_98 = arith.constant dense<0.000000e+00> : vector<16x1xf32>
    %117 = tpu.matmul %114, %0, %cst_98 {dimension_numbers = #tpu.dot_dimension_numbers<[1], [0], [0], [1], [0, 0, 1, 1], [], []>} : vector<16x512xf32>, vector<512x1xf32>, vector<16x1xf32> -> vector<16x1xf32>
    %118 = arith.mulf %114, %114 : vector<16x512xf32>
    %cst_99 = arith.constant dense<0.000000e+00> : vector<16x1xf32>
    %119 = tpu.matmul %118, %0, %cst_99 {dimension_numbers = #tpu.dot_dimension_numbers<[1], [0], [0], [1], [0, 0, 1, 1], [], []>} : vector<16x512xf32>, vector<512x1xf32>, vector<16x1xf32> -> vector<16x1xf32>
    %cst_100 = arith.constant 0.001953125 : f32
    %120 = vector.broadcast %cst_100 : f32 to vector<16x1xf32>
    %121 = arith.mulf %117, %120 : vector<16x1xf32>
    %cst_101 = arith.constant 0.001953125 : f32
    %122 = vector.broadcast %cst_101 : f32 to vector<16x1xf32>
    %123 = arith.mulf %119, %122 : vector<16x1xf32>
    %124 = arith.mulf %121, %121 : vector<16x1xf32>
    %125 = arith.subf %123, %124 : vector<16x1xf32>
    %cst_102 = arith.constant 9.99999974E-6 : f32
    %126 = vector.broadcast %cst_102 : f32 to vector<16x1xf32>
    %127 = arith.addf %125, %126 : vector<16x1xf32>
    %128 = math.rsqrt %127 : vector<16x1xf32>
    %129 = arith.mulf %115, %128 : vector<16x1xf32>
    %130 = vector.broadcast %129 : vector<16x1xf32> to vector<16x512xf32>
    %131 = arith.mulf %114, %130 : vector<16x512xf32>
    %132 = arith.mulf %121, %129 : vector<16x1xf32>
    %133 = arith.subf %116, %132 : vector<16x1xf32>
    %134 = vector.broadcast %133 : vector<16x1xf32> to vector<16x512xf32>
    %135 = arith.addf %131, %134 : vector<16x512xf32>
    %136 = arith.addf %135, %1 : vector<16x512xf32>
    %cst_103 = arith.constant 0.000000e+00 : f32
    %137 = vector.broadcast %cst_103 : f32 to vector<16x512xf32>
    %138 = arith.maximumf %136, %137 : vector<16x512xf32>
    %c0_104 = arith.constant 0 : index
    %c0_105 = arith.constant 0 : index
    %139 = vector.load %arg9[%c0_104, %c0_105] : memref<16x512xf32, #tpu.memory_space<vmem>>, vector<16x512xf32>
    tpu.vector_store %arg9[%c0_104, %c0_105], %138 {strides = array<i32>} : memref<16x512xf32, #tpu.memory_space<vmem>>, vector<16x512xf32>,
    return
  }
}

</mosaic_0001>

<llo_original>
// kernel: tpu_custom_call.1
$region0: #{tpu_custom_call.1}
  #allocation0 [shape = 'u32[]', space=smem, size = 0x4, offset = 0x4, fixed_abs, tag = 'smem constant byte address 0x4 - core index']
  #allocation1 [shape = 'u32[72,128]{1,0:T(1,128)}', space=vmem, size = 0x9000, scoped, tag = 'internal scratch']
  #allocation2 [shape = 'bf16[144,512]{1,0:T(8,128)(2,1)}', space=vmem, size = 0x24000, scoped, tag = 'scratch operand']
  %s0 = inlined_call_operand.hbm [shape: f32[16,512], index: 0, kind: input, shape index: {}]
  %s1 = inlined_call_operand.vmem [shape: f32[144,512], index: 1, kind: input, shape index: {}]
  %s2 = inlined_call_operand.vmem [shape: f32[512,1], index: 2, kind: input, shape index: {}]
  %s3 = inlined_call_operand.hbm [shape: bf16[16,144], index: 3, kind: input, shape index: {}]
  %s4 = inlined_call_operand.vmem [shape: f32[16,1], index: 4, kind: input, shape index: {}]
  %s5 = inlined_call_operand.vmem [shape: f32[16,1], index: 5, kind: input, shape index: {}]
  %s6 = inlined_call_operand.hbm [shape: bf16[16,144], index: 6, kind: input, shape index: {}]
  %s7 = inlined_call_operand.vmem [shape: f32[16,1], index: 7, kind: input, shape index: {}]
  %s8 = inlined_call_operand.vmem [shape: f32[16,1], index: 8, kind: input, shape index: {}]
  %s9 = inlined_call_operand.hbm [shape: f32[16,512], index: 9, kind: output, shape index: {}]
  %s10 = sld [smem:[#allocation0]]
  $region58: #{tpu_custom_call.1} parent=0
    _
  %s12 = ssub.s32 1, %s10
  %s13 = scalar_select 0, %s12, %s10
  $region1: #{tpu_custom_call.1} parent=0
    #allocation3 [shape = 'u8[32768]{0}', space=vmem, size = 0x8000, scoped, tag = 'input window, operand 0, single buffered']
    #allocation4 [shape = 's32[1]{0}', space=sflag, size = 0x4, scoped, tag = 'scoped memory for tpu_custom_call.1']
    #allocation5 [shape = 's32[1]{0}', space=sflag, size = 0x4, scoped, tag = 'scoped memory for tpu_custom_call.1']
    #allocation6 [shape = 'u8[8192]{0}', space=vmem, size = 0x2000, scoped, tag = 'input window, operand 3, single buffered']
    #allocation7 [shape = 's32[1]{0}', space=sflag, size = 0x4, scoped, tag = 'scoped memory for tpu_custom_call.1']
    #allocation8 [shape = 'u8[8192]{0}', space=vmem, size = 0x2000, scoped, tag = 'input window, operand 6, single buffered']
    #allocation9 [shape = 'u8[32768]{0}', space=vmem, size = 0x8000, scoped, tag = 'output window, operand 0, single buffered']
    %14 = vsyncpa [#allocation4], 0
    %15 = vsyncpa [#allocation7], 0
    %16 = vsyncpa [#allocation5], 0
    // Predicated region
    $region2: #{tpu_custom_call.1} parent=1 // pred_check
      _
    $region3: #{tpu_custom_call.1} parent=1 // pred_check_branch
      %18 = sbr.rel (0) target = $region5
    $region4: #{tpu_custom_call.1} parent=1 // pred_region
      %20 = vsyncadd [#allocation4], 0
      %s21 = sshll.u32 %s0, 4
      %s22 = int_to_ptr.hbm [resolvable:$true] %s21
      %s23 = sshll.u32 [#allocation3], 4
      %s24 = int_to_ptr.vmem [resolvable:$true] %s23
      %29 = dma.hbm_to_vmem [thread:$0]  %s22, 1024, %s24, [#allocation4], 512, 512, 32
    $region5: #{tpu_custom_call.1} parent=1 // pred_fallthru
      _
    // Predicated region
    $region6: #{tpu_custom_call.1} parent=1 // pred_check
      _
    $region7: #{tpu_custom_call.1} parent=1 // pred_check_branch
      %31 = sbr.rel (0) target = $region9
    $region8: #{tpu_custom_call.1} parent=1 // pred_region
      _
    $region9: #{tpu_custom_call.1} parent=1 // pred_fallthru
      _
    // Predicated region
    $region10: #{tpu_custom_call.1} parent=1 // pred_check
      _
    $region11: #{tpu_custom_call.1} parent=1 // pred_check_branch
      %33 = sbr.rel (0) target = $region13
    $region12: #{tpu_custom_call.1} parent=1 // pred_region
      _
    $region13: #{tpu_custom_call.1} parent=1 // pred_fallthru
      _
    // Predicated region
    $region14: #{tpu_custom_call.1} parent=1 // pred_check
      _
    $region15: #{tpu_custom_call.1} parent=1 // pred_check_branch
      %35 = sbr.rel (0) target = $region17
    $region16: #{tpu_custom_call.1} parent=1 // pred_region
      %37 = vsyncadd [#allocation7], 0
      %s38 = sshll.u32 %s3, 4
      %s39 = int_to_ptr.hbm [resolvable:$true] %s38
      %s40 = sshll.u32 [#allocation6], 4
      %s41 = int_to_ptr.vmem [resolvable:$true] %s40
      %46 = dma.hbm_to_vmem [thread:$0]  %s39, 256, %s41, [#allocation7], 128, 128, 8
    $region17: #{tpu_custom_call.1} parent=1 // pred_fallthru
      _
    // Predicated region
    $region18: #{tpu_custom_call.1} parent=1 // pred_check
      _
    $region19: #{tpu_custom_call.1} parent=1 // pred_check_branch
      %48 = sbr.rel (0) target = $region21
    $region20: #{tpu_custom_call.1} parent=1 // pred_region
      _
    $region21: #{tpu_custom_call.1} parent=1 // pred_fallthru
      _
    // Predicated region
    $region22: #{tpu_custom_call.1} parent=1 // pred_check
      _
    $region23: #{tpu_custom_call.1} parent=1 // pred_check_branch
      %50 = sbr.rel (0) target = $region25
    $region24: #{tpu_custom_call.1} parent=1 // pred_region
      _
    $region25: #{tpu_custom_call.1} parent=1 // pred_fallthru
      _
    // Predicated region
    $region26: #{tpu_custom_call.1} parent=1 // pred_check
      _
    $region27: #{tpu_custom_call.1} parent=1 // pred_check_branch
      %52 = sbr.rel (0) target = $region29
    $region28: #{tpu_custom_call.1} parent=1 // pred_region
      %54 = vsyncadd [#allocation7], 0
      %s55 = sshll.u32 %s6, 4
      %s56 = int_to_ptr.hbm [resolvable:$true] %s55
      %s57 = sshll.u32 [#allocation8], 4
      %s58 = int_to_ptr.vmem [resolvable:$true] %s57
      %63 = dma.hbm_to_vmem [thread:$0]  %s56, 256, %s58, [#allocation7], 128, 128, 8
    $region29: #{tpu_custom_call.1} parent=1 // pred_fallthru
      _
    // Predicated region
    $region30: #{tpu_custom_call.1} parent=1 // pred_check
      _
    $region31: #{tpu_custom_call.1} parent=1 // pred_check_branch
      %65 = sbr.rel (0) target = $region33
    $region32: #{tpu_custom_call.1} parent=1 // pred_region
      _
    $region33: #{tpu_custom_call.1} parent=1 // pred_fallthru
      _
    // Predicated region
    $region34: #{tpu_custom_call.1} parent=1 // pred_check
      _
    $region35: #{tpu_custom_call.1} parent=1 // pred_check_branch
      %67 = sbr.rel (0) target = $region37
    $region36: #{tpu_custom_call.1} parent=1 // pred_region
      _
    $region37: #{tpu_custom_call.1} parent=1 // pred_fallthru
      _
    // Predicated region
    $region38: #{tpu_custom_call.1} parent=1 // pred_check
      _
    $region39: #{tpu_custom_call.1} parent=1 // pred_check_branch
      %69 = sbr.rel (0) target = $region41
    $region40: #{tpu_custom_call.1} parent=1 // pred_region
      %71 = dma.done [#allocation4], 1024
    $region41: #{tpu_custom_call.1} parent=1 // pred_fallthru
      _
    // Predicated region
    $region42: #{tpu_custom_call.1} parent=1 // pred_check
      _
    $region43: #{tpu_custom_call.1} parent=1 // pred_check_branch
      %73 = sbr.rel (0) target = $region45
    $region44: #{tpu_custom_call.1} parent=1 // pred_region
      %75 = dma.done [#allocation7], 256
    $region45: #{tpu_custom_call.1} parent=1 // pred_fallthru
      _
    // Predicated region
    $region46: #{tpu_custom_call.1} parent=1 // pred_check
      _
    $region47: #{tpu_custom_call.1} parent=1 // pred_check_branch
      %77 = sbr.rel (0) target = $region49
    $region48: #{tpu_custom_call.1} parent=1 // pred_region
      %79 = dma.done [#allocation7], 256
    $region49: #{tpu_custom_call.1} parent=1 // pred_fallthru
      _
    %v81 = vld [vmem:[%s2] sm:$0xff]
    %v82 = vld [vmem:[%s2 + $0x8] sm:$0xff]
    %v83 = vld [vmem:[%s2 + $0x10] sm:$0xff]
    %v84 = vld [vmem:[%s2 + $0x18] sm:$0xff]
    %v85 = vld [vmem:[%s2 + $0x20] sm:$0xff]
    %v86 = vld [vmem:[%s2 + $0x28] sm:$0xff]
    %v87 = vld [vmem:[%s2 + $0x30] sm:$0xff]
    %v88 = vld [vmem:[%s2 + $0x38] sm:$0xff]
    %v89 = vld [vmem:[%s2 + $0x40] sm:$0xff]
    %v90 = vld [vmem:[%s2 + $0x48] sm:$0xff]
    %v91 = vld [vmem:[%s2 + $0x50] sm:$0xff]
    %v92 = vld [vmem:[%s2 + $0x58] sm:$0xff]
    %v93 = vld [vmem:[%s2 + $0x60] sm:$0xff]
    %v94 = vld [vmem:[%s2 + $0x68] sm:$0xff]
    %v95 = vld [vmem:[%s2 + $0x70] sm:$0xff]
    %v96 = vld [vmem:[%s2 + $0x78] sm:$0xff]
    %v97 = vld [vmem:[%s2 + $0x80] sm:$0xff]
    %v98 = vld [vmem:[%s2 + $0x88] sm:$0xff]
    %v99 = vld [vmem:[%s2 + $0x90] sm:$0xff]
    %v100 = vld [vmem:[%s2 + $0x98] sm:$0xff]
    %v101 = vld [vmem:[%s2 + $0xa0] sm:$0xff]
    %v102 = vld [vmem:[%s2 + $0xa8] sm:$0xff]
    %v103 = vld [vmem:[%s2 + $0xb0] sm:$0xff]
    %v104 = vld [vmem:[%s2 + $0xb8] sm:$0xff]
    %v105 = vld [vmem:[%s2 + $0xc0] sm:$0xff]
    %v106 = vld [vmem:[%s2 + $0xc8] sm:$0xff]
    %v107 = vld [vmem:[%s2 + $0xd0] sm:$0xff]
    %v108 = vld [vmem:[%s2 + $0xd8] sm:$0xff]
    %v109 = vld [vmem:[%s2 + $0xe0] sm:$0xff]
    %v110 = vld [vmem:[%s2 + $0xe8] sm:$0xff]
    %v111 = vld [vmem:[%s2 + $0xf0] sm:$0xff]
    %v112 = vld [vmem:[%s2 + $0xf8] sm:$0xff]
    %v113 = vld [vmem:[%s2 + $0x100] sm:$0xff]
    %v114 = vld [vmem:[%s2 + $0x108] sm:$0xff]
    %v115 = vld [vmem:[%s2 + $0x110] sm:$0xff]
    %v116 = vld [vmem:[%s2 + $0x118] sm:$0xff]
    %v117 = vld [vmem:[%s2 + $0x120] sm:$0xff]
    %v118 = vld [vmem:[%s2 + $0x128] sm:$0xff]
    %v119 = vld [vmem:[%s2 + $0x130] sm:$0xff]
    %v120 = vld [vmem:[%s2 + $0x138] sm:$0xff]
    %v121 = vld [vmem:[%s2 + $0x140] sm:$0xff]
    %v122 = vld [vmem:[%s2 + $0x148] sm:$0xff]
    %v123 = vld [vmem:[%s2 + $0x150] sm:$0xff]
    %v124 = vld [vmem:[%s2 + $0x158] sm:$0xff]
    %v125 = vld [vmem:[%s2 + $0x160] sm:$0xff]
    %v126 = vld [vmem:[%s2 + $0x168] sm:$0xff]
    %v127 = vld [vmem:[%s2 + $0x170] sm:$0xff]
    %v128 = vld [vmem:[%s2 + $0x178] sm:$0xff]
    %v129 = vld [vmem:[%s2 + $0x180] sm:$0xff]
    %v130 = vld [vmem:[%s2 + $0x188] sm:$0xff]
    %v131 = vld [vmem:[%s2 + $0x190] sm:$0xff]
    %v132 = vld [vmem:[%s2 + $0x198] sm:$0xff]
    %v133 = vld [vmem:[%s2 + $0x1a0] sm:$0xff]
    %v134 = vld [vmem:[%s2 + $0x1a8] sm:$0xff]
    %v135 = vld [vmem:[%s2 + $0x1b0] sm:$0xff]
    %v136 = vld [vmem:[%s2 + $0x1b8] sm:$0xff]
    %v137 = vld [vmem:[%s2 + $0x1c0] sm:$0xff]
    %v138 = vld [vmem:[%s2 + $0x1c8] sm:$0xff]
    %v139 = vld [vmem:[%s2 + $0x1d0] sm:$0xff]
    %v140 = vld [vmem:[%s2 + $0x1d8] sm:$0xff]
    %v141 = vld [vmem:[%s2 + $0x1e0] sm:$0xff]
    %v142 = vld [vmem:[%s2 + $0x1e8] sm:$0xff]
    %v143 = vld [vmem:[%s2 + $0x1f0] sm:$0xff]
    %v144 = vld [vmem:[%s2 + $0x1f8] sm:$0xff]
    %v145 = vld [vmem:[#allocation3] sm:$0xff]
    %v146 = vld [vmem:[#allocation3 + $0x8] sm:$0xff]
    %v147 = vld [vmem:[#allocation3 + $0x10] sm:$0xff]
    %v148 = vld [vmem:[#allocation3 + $0x18] sm:$0xff]
    %v149 = vld [vmem:[#allocation3 + $0x20] sm:$0xff]
    %v150 = vld [vmem:[#allocation3 + $0x28] sm:$0xff]
    %v151 = vld [vmem:[#allocation3 + $0x30] sm:$0xff]
    %v152 = vld [vmem:[#allocation3 + $0x38] sm:$0xff]
    %153 = vrot.lane.b32.xlu0 %v145, 16
    %v154 = vpop.permute.xlu0 %153
    %155 = vrot.lane.b32.xlu0 %v149, 16
    %v156 = vpop.permute.xlu0 %155
    %157 = vrot.lane.b32.xlu0 %v146, 16
    %v158 = vpop.permute.xlu0 %157
    %159 = vrot.lane.b32.xlu0 %v150, 16
    %v160 = vpop.permute.xlu0 %159
    %161 = vrot.lane.b32.xlu0 %v147, 16
    %v162 = vpop.permute.xlu0 %161
    %163 = vrot.lane.b32.xlu0 %v151, 16
    %v164 = vpop.permute.xlu0 %163
    %165 = vrot.lane.b32.xlu0 %v148, 16
    %v166 = vpop.permute.xlu0 %165
    %167 = vrot.lane.b32.xlu0 %v152, 16
    %v168 = vpop.permute.xlu0 %167
    %v169 = vlaneseq
    %v170 = vand.u32 %v169, 127
    %vm171 = vcmp.lt.s32.totalorder %v170, 16
    %v172 = vsel %vm171, %v162, %v166
    %v173 = vsel %vm171, %v164, %v168
    %v174 = vsel %vm171, %v158, %v162
    %v175 = vsel %vm171, %v160, %v164
    %v176 = vsel %vm171, %v154, %v158
    %v177 = vsel %vm171, %v156, %v160
    %v178 = vsel %vm171, %v166, %v154
    %v179 = vsel %vm171, %v168, %v156
    %180 = vrot.lane.b32.xlu0 %v145, 112
    %v181 = vpop.permute.xlu0 %180
    %182 = vrot.lane.b32.xlu0 %v149, 112
    %v183 = vpop.permute.xlu0 %182
    %184 = vrot.lane.b32.xlu0 %v146, 112
    %v185 = vpop.permute.xlu0 %184
    %186 = vrot.lane.b32.xlu0 %v150, 112
    %v187 = vpop.permute.xlu0 %186
    %188 = vrot.lane.b32.xlu0 %v147, 112
    %v189 = vpop.permute.xlu0 %188
    %190 = vrot.lane.b32.xlu0 %v151, 112
    %v191 = vpop.permute.xlu0 %190
    %192 = vrot.lane.b32.xlu0 %v148, 112
    %v193 = vpop.permute.xlu0 %192
    %194 = vrot.lane.b32.xlu0 %v152, 112
    %v195 = vpop.permute.xlu0 %194
    %vm196 = vcmp.lt.s32.totalorder %v170, 112
    %v197 = vsel %vm196, %v189, %v193
    %v198 = vsel %vm196, %v191, %v195
    %v199 = vsel %vm196, %v185, %v189
    %v200 = vsel %vm196, %v187, %v191
    %v201 = vsel %vm196, %v181, %v185
    %v202 = vsel %vm196, %v183, %v187
    %v203 = vsel %vm196, %v193, %v181
    %v204 = vsel %vm196, %v195, %v183
    %205 = vrot.lane.b32.xlu0 %v178, 1
    %v206 = vpop.permute.xlu0 %205
    %207 = vrot.lane.b32.xlu0 %v179, 1
    %v208 = vpop.permute.xlu0 %207
    %209 = vrot.lane.b32.xlu0 %v176, 1
    %v210 = vpop.permute.xlu0 %209
    %211 = vrot.lane.b32.xlu0 %v177, 1
    %v212 = vpop.permute.xlu0 %211
    %213 = vrot.lane.b32.xlu0 %v174, 1
    %v214 = vpop.permute.xlu0 %213
    %215 = vrot.lane.b32.xlu0 %v175, 1
    %v216 = vpop.permute.xlu0 %215
    %217 = vrot.lane.b32.xlu0 %v172, 1
    %v218 = vpop.permute.xlu0 %217
    %219 = vrot.lane.b32.xlu0 %v173, 1
    %v220 = vpop.permute.xlu0 %219
    %vm221 = vcmp.lt.s32.totalorder %v170, 1
    %v222 = vsel %vm221, %v214, %v218
    %v223 = vsel %vm221, %v216, %v220
    %v224 = vsel %vm221, %v210, %v214
    %v225 = vsel %vm221, %v212, %v216
    %v226 = vsel %vm221, %v206, %v210
    %v227 = vsel %vm221, %v208, %v212
    %v228 = vsel %vm221, %v218, %v206
    %v229 = vsel %vm221, %v220, %v208
    %v230 = vld [vmem:[%s1] sm:$0xff]
    %v231 = vld [vmem:[%s1 + $0x8] sm:$0xff]
    %v232 = vld [vmem:[%s1 + $0x10] sm:$0xff]
    %v233 = vld [vmem:[%s1 + $0x18] sm:$0xff]
    %v234 = vld [vmem:[%s1 + $0x20] sm:$0xff]
    %v235 = vld [vmem:[%s1 + $0x28] sm:$0xff]
    %v236 = vld [vmem:[%s1 + $0x30] sm:$0xff]
    %v237 = vld [vmem:[%s1 + $0x38] sm:$0xff]
    %v238 = vmul.f32 %v228, %v230
    %v239 = vmul.f32 %v226, %v231
    %v240 = vmul.f32 %v224, %v232
    %v241 = vmul.f32 %v222, %v233
    %v242 = vmul.f32 %v229, %v234
    %v243 = vmul.f32 %v227, %v235
    %v244 = vmul.f32 %v225, %v236
    %v245 = vmul.f32 %v223, %v237
    %v246 = vpack.c.bf16 %v239, %v238
    %v247 = vpack.c.bf16 %v241, %v240
    %v248 = vpack.c.bf16 %v243, %v242
    %v249 = vpack.c.bf16 %v245, %v244
    %250 = vst [vmem:[#allocation2] sm:$0xff] %v246
    %251 = vst [vmem:[#allocation2 + $0x8] sm:$0xff] %v247
    %252 = vst [vmem:[#allocation2 + $0x10] sm:$0xff] %v248
    %253 = vst [vmem:[#allocation2 + $0x18] sm:$0xff] %v249
    %v254 = vld [vmem:[%s1 + $0x40] sm:$0xff]
    %v255 = vld [vmem:[%s1 + $0x48] sm:$0xff]
    %v256 = vld [vmem:[%s1 + $0x50] sm:$0xff]
    %v257 = vld [vmem:[%s1 + $0x58] sm:$0xff]
    %v258 = vld [vmem:[%s1 + $0x60] sm:$0xff]
    %v259 = vld [vmem:[%s1 + $0x68] sm:$0xff]
    %v260 = vld [vmem:[%s1 + $0x70] sm:$0xff]
    %v261 = vld [vmem:[%s1 + $0x78] sm:$0xff]
    %v262 = vmul.f32 %v178, %v254
    %v263 = vmul.f32 %v176, %v255
    %v264 = vmul.f32 %v174, %v256
    %v265 = vmul.f32 %v172, %v257
    %v266 = vmul.f32 %v179, %v258
    %v267 = vmul.f32 %v177, %v259
    %v268 = vmul.f32 %v175, %v260
    %v269 = vmul.f32 %v173, %v261
    %v270 = vpack.c.bf16 %v263, %v262
    %v271 = vpack.c.bf16 %v265, %v264
    %v272 = vpack.c.bf16 %v267, %v266
    %v273 = vpack.c.bf16 %v269, %v268
    %274 = vst [vmem:[#allocation2 + $0x20] sm:$0xff] %v270
    %275 = vst [vmem:[#allocation2 + $0x28] sm:$0xff] %v271
    %276 = vst [vmem:[#allocation2 + $0x30] sm:$0xff] %v272
    %277 = vst [vmem:[#allocation2 + $0x38] sm:$0xff] %v273
    %278 = vrot.lane.b32.xlu0 %v178, 127
    %v279 = vpop.permute.xlu0 %278
    %280 = vrot.lane.b32.xlu0 %v179, 127
    %v281 = vpop.permute.xlu0 %280
    %282 = vrot.lane.b32.xlu0 %v176, 127
    %v283 = vpop.permute.xlu0 %282
    %284 = vrot.lane.b32.xlu0 %v177, 127
    %v285 = vpop.permute.xlu0 %284
    %286 = vrot.lane.b32.xlu0 %v174, 127
    %v287 = vpop.permute.xlu0 %286
    %288 = vrot.lane.b32.xlu0 %v175, 127
    %v289 = vpop.permute.xlu0 %288
    %290 = vrot.lane.b32.xlu0 %v172, 127
    %v291 = vpop.permute.xlu0 %290
    %292 = vrot.lane.b32.xlu0 %v173, 127
    %v293 = vpop.permute.xlu0 %292
    %vm294 = vcmp.lt.s32.totalorder %v170, 127
    %v295 = vsel %vm294, %v287, %v291
    %v296 = vsel %vm294, %v289, %v293
    %v297 = vsel %vm294, %v283, %v287
    %v298 = vsel %vm294, %v285, %v289
    %v299 = vsel %vm294, %v279, %v283
    %v300 = vsel %vm294, %v281, %v285
    %v301 = vsel %vm294, %v291, %v279
    %v302 = vsel %vm294, %v293, %v281
    %v303 = vld [vmem:[%s1 + $0x80] sm:$0xff]
    %v304 = vld [vmem:[%s1 + $0x88] sm:$0xff]
    %v305 = vld [vmem:[%s1 + $0x90] sm:$0xff]
    %v306 = vld [vmem:[%s1 + $0x98] sm:$0xff]
    %v307 = vld [vmem:[%s1 + $0xa0] sm:$0xff]
    %v308 = vld [vmem:[%s1 + $0xa8] sm:$0xff]
    %v309 = vld [vmem:[%s1 + $0xb0] sm:$0xff]
    %v310 = vld [vmem:[%s1 + $0xb8] sm:$0xff]
    %v311 = vmul.f32 %v299, %v303
    %v312 = vmul.f32 %v297, %v304
    %v313 = vmul.f32 %v295, %v305
    %v314 = vmul.f32 %v301, %v306
    %v315 = vmul.f32 %v300, %v307
    %v316 = vmul.f32 %v298, %v308
    %v317 = vmul.f32 %v296, %v309
    %v318 = vmul.f32 %v302, %v310
    %v319 = vpack.c.bf16 %v312, %v311
    %v320 = vpack.c.bf16 %v314, %v313
    %v321 = vpack.c.bf16 %v316, %v315
    %v322 = vpack.c.bf16 %v318, %v317
    %323 = vst [vmem:[#allocation2 + $0x40] sm:$0xff] %v319
    %324 = vst [vmem:[#allocation2 + $0x48] sm:$0xff] %v320
    %325 = vst [vmem:[#allocation2 + $0x50] sm:$0xff] %v321
    %326 = vst [vmem:[#allocation2 + $0x58] sm:$0xff] %v322
    %327 = vrot.lane.b32.xlu0 %v145, 1
    %v328 = vpop.permute.xlu0 %327
    %329 = vrot.lane.b32.xlu0 %v149, 1
    %v330 = vpop.permute.xlu0 %329
    %331 = vrot.lane.b32.xlu0 %v146, 1
    %v332 = vpop.permute.xlu0 %331
    %333 = vrot.lane.b32.xlu0 %v150, 1
    %v334 = vpop.permute.xlu0 %333
    %335 = vrot.lane.b32.xlu0 %v147, 1
    %v336 = vpop.permute.xlu0 %335
    %337 = vrot.lane.b32.xlu0 %v151, 1
    %v338 = vpop.permute.xlu0 %337
    %339 = vrot.lane.b32.xlu0 %v148, 1
    %v340 = vpop.permute.xlu0 %339
    %341 = vrot.lane.b32.xlu0 %v152, 1
    %v342 = vpop.permute.xlu0 %341
    %v343 = vsel %vm221, %v336, %v340
    %v344 = vsel %vm221, %v338, %v342
    %v345 = vsel %vm221, %v332, %v336
    %v346 = vsel %vm221, %v334, %v338
    %v347 = vsel %vm221, %v328, %v332
    %v348 = vsel %vm221, %v330, %v334
    %v349 = vsel %vm221, %v340, %v328
    %v350 = vsel %vm221, %v342, %v330
    %v351 = vld [vmem:[%s1 + $0xc0] sm:$0xff]
    %v352 = vld [vmem:[%s1 + $0xc8] sm:$0xff]
    %v353 = vld [vmem:[%s1 + $0xd0] sm:$0xff]
    %v354 = vld [vmem:[%s1 + $0xd8] sm:$0xff]
    %v355 = vld [vmem:[%s1 + $0xe0] sm:$0xff]
    %v356 = vld [vmem:[%s1 + $0xe8] sm:$0xff]
    %v357 = vld [vmem:[%s1 + $0xf0] sm:$0xff]
    %v358 = vld [vmem:[%s1 + $0xf8] sm:$0xff]
    %v359 = vmul.f32 %v349, %v351
    %v360 = vmul.f32 %v347, %v352
    %v361 = vmul.f32 %v345, %v353
    %v362 = vmul.f32 %v343, %v354
    %v363 = vmul.f32 %v350, %v355
    %v364 = vmul.f32 %v348, %v356
    %v365 = vmul.f32 %v346, %v357
    %v366 = vmul.f32 %v344, %v358
    %v367 = vpack.c.bf16 %v360, %v359
    %v368 = vpack.c.bf16 %v362, %v361
    %v369 = vpack.c.bf16 %v364, %v363
    %v370 = vpack.c.bf16 %v366, %v365
    %371 = vst [vmem:[#allocation2 + $0x60] sm:$0xff] %v367
    %372 = vst [vmem:[#allocation2 + $0x68] sm:$0xff] %v368
    %373 = vst [vmem:[#allocation2 + $0x70] sm:$0xff] %v369
    %374 = vst [vmem:[#allocation2 + $0x78] sm:$0xff] %v370
    %v375 = vpack.c.bf16 %v146, %v145
    %v376 = vpack.c.bf16 %v148, %v147
    %v377 = vpack.c.bf16 %v150, %v149
    %v378 = vpack.c.bf16 %v152, %v151
    %379 = vst [vmem:[#allocation2 + $0x80] sm:$0xff] %v375
    %380 = vst [vmem:[#allocation2 + $0x88] sm:$0xff] %v376
    %381 = vst [vmem:[#allocation2 + $0x90] sm:$0xff] %v377
    %382 = vst [vmem:[#allocation2 + $0x98] sm:$0xff] %v378
    %383 = vrot.lane.b32.xlu0 %v145, 127
    %v384 = vpop.permute.xlu0 %383
    %385 = vrot.lane.b32.xlu0 %v149, 127
    %v386 = vpop.permute.xlu0 %385
    %387 = vrot.lane.b32.xlu0 %v146, 127
    %v388 = vpop.permute.xlu0 %387
    %389 = vrot.lane.b32.xlu0 %v150, 127
    %v390 = vpop.permute.xlu0 %389
    %391 = vrot.lane.b32.xlu0 %v147, 127
    %v392 = vpop.permute.xlu0 %391
    %393 = vrot.lane.b32.xlu0 %v151, 127
    %v394 = vpop.permute.xlu0 %393
    %395 = vrot.lane.b32.xlu0 %v148, 127
    %v396 = vpop.permute.xlu0 %395
    %397 = vrot.lane.b32.xlu0 %v152, 127
    %v398 = vpop.permute.xlu0 %397
    %v399 = vsel %vm294, %v392, %v396
    %v400 = vsel %vm294, %v394, %v398
    %v401 = vsel %vm294, %v388, %v392
    %v402 = vsel %vm294, %v390, %v394
    %v403 = vsel %vm294, %v384, %v388
    %v404 = vsel %vm294, %v386, %v390
    %v405 = vsel %vm294, %v396, %v384
    %v406 = vsel %vm294, %v398, %v386
    %v407 = vld [vmem:[%s1 + $0x140] sm:$0xff]
    %v408 = vld [vmem:[%s1 + $0x148] sm:$0xff]
    %v409 = vld [vmem:[%s1 + $0x150] sm:$0xff]
    %v410 = vld [vmem:[%s1 + $0x158] sm:$0xff]
    %v411 = vld [vmem:[%s1 + $0x160] sm:$0xff]
    %v412 = vld [vmem:[%s1 + $0x168] sm:$0xff]
    %v413 = vld [vmem:[%s1 + $0x170] sm:$0xff]
    %v414 = vld [vmem:[%s1 + $0x178] sm:$0xff]
    %v415 = vmul.f32 %v403, %v407
    %v416 = vmul.f32 %v401, %v408
    %v417 = vmul.f32 %v399, %v409
    %v418 = vmul.f32 %v405, %v410
    %v419 = vmul.f32 %v404, %v411
    %v420 = vmul.f32 %v402, %v412
    %v421 = vmul.f32 %v400, %v413
    %v422 = vmul.f32 %v406, %v414
    %v423 = vpack.c.bf16 %v416, %v415
    %v424 = vpack.c.bf16 %v418, %v417
    %v425 = vpack.c.bf16 %v420, %v419
    %v426 = vpack.c.bf16 %v422, %v421
    %427 = vst [vmem:[#allocation2 + $0xa0] sm:$0xff] %v423
    %428 = vst [vmem:[#allocation2 + $0xa8] sm:$0xff] %v424
    %429 = vst [vmem:[#allocation2 + $0xb0] sm:$0xff] %v425
    %430 = vst [vmem:[#allocation2 + $0xb8] sm:$0xff] %v426
    %431 = vrot.lane.b32.xlu0 %v201, 1
    %v432 = vpop.permute.xlu0 %431
    %433 = vrot.lane.b32.xlu0 %v202, 1
    %v434 = vpop.permute.xlu0 %433
    %435 = vrot.lane.b32.xlu0 %v199, 1
    %v436 = vpop.permute.xlu0 %435
    %437 = vrot.lane.b32.xlu0 %v200, 1
    %v438 = vpop.permute.xlu0 %437
    %439 = vrot.lane.b32.xlu0 %v197, 1
    %v440 = vpop.permute.xlu0 %439
    %441 = vrot.lane.b32.xlu0 %v198, 1
    %v442 = vpop.permute.xlu0 %441
    %443 = vrot.lane.b32.xlu0 %v203, 1
    %v444 = vpop.permute.xlu0 %443
    %445 = vrot.lane.b32.xlu0 %v204, 1
    %v446 = vpop.permute.xlu0 %445
    %v447 = vsel %vm221, %v440, %v444
    %v448 = vsel %vm221, %v442, %v446
    %v449 = vsel %vm221, %v436, %v440
    %v450 = vsel %vm221, %v438, %v442
    %v451 = vsel %vm221, %v432, %v436
    %v452 = vsel %vm221, %v434, %v438
    %v453 = vsel %vm221, %v444, %v432
    %v454 = vsel %vm221, %v446, %v434
    %v455 = vld [vmem:[%s1 + $0x180] sm:$0xff]
    %v456 = vld [vmem:[%s1 + $0x188] sm:$0xff]
    %v457 = vld [vmem:[%s1 + $0x190] sm:$0xff]
    %v458 = vld [vmem:[%s1 + $0x198] sm:$0xff]
    %v459 = vld [vmem:[%s1 + $0x1a0] sm:$0xff]
    %v460 = vld [vmem:[%s1 + $0x1a8] sm:$0xff]
    %v461 = vld [vmem:[%s1 + $0x1b0] sm:$0xff]
    %v462 = vld [vmem:[%s1 + $0x1b8] sm:$0xff]
    %v463 = vmul.f32 %v453, %v455
    %v464 = vmul.f32 %v451, %v456
    %v465 = vmul.f32 %v449, %v457
    %v466 = vmul.f32 %v447, %v458
    %v467 = vmul.f32 %v454, %v459
    %v468 = vmul.f32 %v452, %v460
    %v469 = vmul.f32 %v450, %v461
    %v470 = vmul.f32 %v448, %v462
    %v471 = vpack.c.bf16 %v464, %v463
    %v472 = vpack.c.bf16 %v466, %v465
    %v473 = vpack.c.bf16 %v468, %v467
    %v474 = vpack.c.bf16 %v470, %v469
    %475 = vst [vmem:[#allocation2 + $0xc0] sm:$0xff] %v471
    %476 = vst [vmem:[#allocation2 + $0xc8] sm:$0xff] %v472
    %477 = vst [vmem:[#allocation2 + $0xd0] sm:$0xff] %v473
    %478 = vst [vmem:[#allocation2 + $0xd8] sm:$0xff] %v474
    %v479 = vld [vmem:[%s1 + $0x1c0] sm:$0xff]
    %v480 = vld [vmem:[%s1 + $0x1c8] sm:$0xff]
    %v481 = vld [vmem:[%s1 + $0x1d0] sm:$0xff]
    %v482 = vld [vmem:[%s1 + $0x1d8] sm:$0xff]
    %v483 = vld [vmem:[%s1 + $0x1e0] sm:$0xff]
    %v484 = vld [vmem:[%s1 + $0x1e8] sm:$0xff]
    %v485 = vld [vmem:[%s1 + $0x1f0] sm:$0xff]
    %v486 = vld [vmem:[%s1 + $0x1f8] sm:$0xff]
    %v487 = vmul.f32 %v201, %v479
    %v488 = vmul.f32 %v199, %v480
    %v489 = vmul.f32 %v197, %v481
    %v490 = vmul.f32 %v203, %v482
    %v491 = vmul.f32 %v202, %v483
    %v492 = vmul.f32 %v200, %v484
    %v493 = vmul.f32 %v198, %v485
    %v494 = vmul.f32 %v204, %v486
    %v495 = vpack.c.bf16 %v488, %v487
    %v496 = vpack.c.bf16 %v490, %v489
    %v497 = vpack.c.bf16 %v492, %v491
    %v498 = vpack.c.bf16 %v494, %v493
    %499 = vst [vmem:[#allocation2 + $0xe0] sm:$0xff] %v495
    %500 = vst [vmem:[#allocation2 + $0xe8] sm:$0xff] %v496
    %501 = vst [vmem:[#allocation2 + $0xf0] sm:$0xff] %v497
    %502 = vst [vmem:[#allocation2 + $0xf8] sm:$0xff] %v498
    %503 = vrot.lane.b32.xlu0 %v201, 127
    %v504 = vpop.permute.xlu0 %503
    %505 = vrot.lane.b32.xlu0 %v202, 127
    %v506 = vpop.permute.xlu0 %505
    %507 = vrot.lane.b32.xlu0 %v199, 127
    %v508 = vpop.permute.xlu0 %507
    %509 = vrot.lane.b32.xlu0 %v200, 127
    %v510 = vpop.permute.xlu0 %509
    %511 = vrot.lane.b32.xlu0 %v197, 127
    %v512 = vpop.permute.xlu0 %511
    %513 = vrot.lane.b32.xlu0 %v198, 127
    %v514 = vpop.permute.xlu0 %513
    %515 = vrot.lane.b32.xlu0 %v203, 127
    %v516 = vpop.permute.xlu0 %515
    %517 = vrot.lane.b32.xlu0 %v204, 127
    %v518 = vpop.permute.xlu0 %517
    %v519 = vsel %vm294, %v512, %v516
    %v520 = vsel %vm294, %v514, %v518
    %v521 = vsel %vm294, %v508, %v512
    %v522 = vsel %vm294, %v510, %v514
    %v523 = vsel %vm294, %v504, %v508
    %v524 = vsel %vm294, %v506, %v510
    %v525 = vsel %vm294, %v516, %v504
    %v526 = vsel %vm294, %v518, %v506
    %v527 = vld [vmem:[%s1 + $0x200] sm:$0xff]
    %v528 = vld [vmem:[%s1 + $0x208] sm:$0xff]
    %v529 = vld [vmem:[%s1 + $0x210] sm:$0xff]
    %v530 = vld [vmem:[%s1 + $0x218] sm:$0xff]
    %v531 = vld [vmem:[%s1 + $0x220] sm:$0xff]
    %v532 = vld [vmem:[%s1 + $0x228] sm:$0xff]
    %v533 = vld [vmem:[%s1 + $0x230] sm:$0xff]
    %v534 = vld [vmem:[%s1 + $0x238] sm:$0xff]
    %v535 = vmul.f32 %v523, %v527
    %v536 = vmul.f32 %v521, %v528
    %v537 = vmul.f32 %v519, %v529
    %v538 = vmul.f32 %v525, %v530
    %v539 = vmul.f32 %v524, %v531
    %v540 = vmul.f32 %v522, %v532
    %v541 = vmul.f32 %v520, %v533
    %v542 = vmul.f32 %v526, %v534
    %v543 = vpack.c.bf16 %v536, %v535
    %v544 = vpack.c.bf16 %v538, %v537
    %v545 = vpack.c.bf16 %v540, %v539
    %v546 = vpack.c.bf16 %v542, %v541
    %547 = vst [vmem:[#allocation2 + $0x100] sm:$0xff] %v543
    %548 = vst [vmem:[#allocation2 + $0x108] sm:$0xff] %v544
    %549 = vst [vmem:[#allocation2 + $0x110] sm:$0xff] %v545
    %550 = vst [vmem:[#allocation2 + $0x118] sm:$0xff] %v546
    %v551 = vld [vmem:[#allocation6] sm:$0xff]
    %v552 = vld [vmem:[#allocation6 + $0x8] sm:$0xff]
    %v553 = vld [vmem:[#allocation2] sm:$0xff]
    %v554 = vld [vmem:[#allocation2 + $0x8] sm:$0xff]
    %v555 = vld [vmem:[#allocation2 + $0x10] sm:$0xff]
    %v556 = vld [vmem:[#allocation2 + $0x18] sm:$0xff]
    %v557 = vld [vmem:[#allocation2 + $0x20] sm:$0xff]
    %v558 = vld [vmem:[#allocation2 + $0x28] sm:$0xff]
    %v559 = vld [vmem:[#allocation2 + $0x30] sm:$0xff]
    %v560 = vld [vmem:[#allocation2 + $0x38] sm:$0xff]
    %v561 = vld [vmem:[#allocation2 + $0x40] sm:$0xff]
    %v562 = vld [vmem:[#allocation2 + $0x48] sm:$0xff]
    %v563 = vld [vmem:[#allocation2 + $0x50] sm:$0xff]
    %v564 = vld [vmem:[#allocation2 + $0x58] sm:$0xff]
    %v565 = vld [vmem:[#allocation2 + $0x60] sm:$0xff]
    %v566 = vld [vmem:[#allocation2 + $0x68] sm:$0xff]
    %v567 = vld [vmem:[#allocation2 + $0x70] sm:$0xff]
    %v568 = vld [vmem:[#allocation2 + $0x78] sm:$0xff]
    %v569 = vld [vmem:[#allocation2 + $0x80] sm:$0xff]
    %v570 = vld [vmem:[#allocation2 + $0x88] sm:$0xff]
    %v571 = vld [vmem:[#allocation2 + $0x90] sm:$0xff]
    %v572 = vld [vmem:[#allocation2 + $0x98] sm:$0xff]
    %v573 = vld [vmem:[#allocation2 + $0xa0] sm:$0xff]
    %v574 = vld [vmem:[#allocation2 + $0xa8] sm:$0xff]
    %v575 = vld [vmem:[#allocation2 + $0xb0] sm:$0xff]
    %v576 = vld [vmem:[#allocation2 + $0xb8] sm:$0xff]
    %v577 = vld [vmem:[#allocation2 + $0xc0] sm:$0xff]
    %v578 = vld [vmem:[#allocation2 + $0xc8] sm:$0xff]
    %v579 = vld [vmem:[#allocation2 + $0xd0] sm:$0xff]
    %v580 = vld [vmem:[#allocation2 + $0xd8] sm:$0xff]
    %v581 = vld [vmem:[#allocation2 + $0xe0] sm:$0xff]
    %v582 = vld [vmem:[#allocation2 + $0xe8] sm:$0xff]
    %v583 = vld [vmem:[#allocation2 + $0xf0] sm:$0xff]
    %v584 = vld [vmem:[#allocation2 + $0xf8] sm:$0xff]
    %v585 = vld [vmem:[#allocation2 + $0x100] sm:$0xff]
    %v586 = vld [vmem:[#allocation2 + $0x108] sm:$0xff]
    %v587 = vld [vmem:[#allocation2 + $0x110] sm:$0xff]
    %v588 = vld [vmem:[#allocation2 + $0x118] sm:$0xff]
    %v591 = vunpack.c.l.b16 %v551
    %v592 = vunpack.c.h.b16 %v551
    %v593 = vunpack.c.l.b16 %v552
    %v594 = vunpack.c.h.b16 %v552
    %v595 = vpack.c.b16 %v593, %v591
    %v596 = vpack.c.b16 %v594, %v592
    %v634 = vunpack.c.l.b16 %v553
    %v635 = vunpack.c.h.b16 %v553
    %v636 = vunpack.c.l.b16 %v554
    %v637 = vunpack.c.h.b16 %v554
    %v638 = vunpack.c.l.b16 %v555
    %v639 = vunpack.c.h.b16 %v555
    %v640 = vunpack.c.l.b16 %v556
    %v641 = vunpack.c.h.b16 %v556
    %v642 = vunpack.c.l.b16 %v557
    %v643 = vunpack.c.h.b16 %v557
    %v644 = vunpack.c.l.b16 %v558
    %v645 = vunpack.c.h.b16 %v558
    %v646 = vunpack.c.l.b16 %v559
    %v647 = vunpack.c.h.b16 %v559
    %v648 = vunpack.c.l.b16 %v560
    %v649 = vunpack.c.h.b16 %v560
    %v650 = vunpack.c.l.b16 %v561
    %v651 = vunpack.c.h.b16 %v561
    %v652 = vunpack.c.l.b16 %v562
    %v653 = vunpack.c.h.b16 %v562
    %v654 = vunpack.c.l.b16 %v563
    %v655 = vunpack.c.h.b16 %v563
    %v656 = vunpack.c.l.b16 %v564
    %v657 = vunpack.c.h.b16 %v564
    %v658 = vunpack.c.l.b16 %v565
    %v659 = vunpack.c.h.b16 %v565
    %v660 = vunpack.c.l.b16 %v566
    %v661 = vunpack.c.h.b16 %v566
    %v662 = vunpack.c.l.b16 %v567
    %v663 = vunpack.c.h.b16 %v567
    %v664 = vunpack.c.l.b16 %v568
    %v665 = vunpack.c.h.b16 %v568
    %v666 = vunpack.c.l.b16 %v569
    %v667 = vunpack.c.h.b16 %v569
    %v668 = vunpack.c.l.b16 %v570
    %v669 = vunpack.c.h.b16 %v570
    %v670 = vunpack.c.l.b16 %v571
    %v671 = vunpack.c.h.b16 %v571
    %v672 = vunpack.c.l.b16 %v572
    %v673 = vunpack.c.h.b16 %v572
    %v674 = vunpack.c.l.b16 %v573
    %v675 = vunpack.c.h.b16 %v573
    %v676 = vunpack.c.l.b16 %v574
    %v677 = vunpack.c.h.b16 %v574
    %v678 = vunpack.c.l.b16 %v575
    %v679 = vunpack.c.h.b16 %v575
    %v680 = vunpack.c.l.b16 %v576
    %v681 = vunpack.c.h.b16 %v576
    %v682 = vunpack.c.l.b16 %v577
    %v683 = vunpack.c.h.b16 %v577
    %v684 = vunpack.c.l.b16 %v578
    %v685 = vunpack.c.h.b16 %v578
    %v686 = vunpack.c.l.b16 %v579
    %v687 = vunpack.c.h.b16 %v579
    %v688 = vunpack.c.l.b16 %v580
    %v689 = vunpack.c.h.b16 %v580
    %v690 = vunpack.c.l.b16 %v581
    %v691 = vunpack.c.h.b16 %v581
    %v692 = vunpack.c.l.b16 %v582
    %v693 = vunpack.c.h.b16 %v582
    %v694 = vunpack.c.l.b16 %v583
    %v695 = vunpack.c.h.b16 %v583
    %v696 = vunpack.c.l.b16 %v584
    %v697 = vunpack.c.h.b16 %v584
    %v698 = vunpack.c.l.b16 %v585
    %v699 = vunpack.c.h.b16 %v585
    %v700 = vunpack.c.l.b16 %v586
    %v701 = vunpack.c.h.b16 %v586
    %v702 = vunpack.c.l.b16 %v587
    %v703 = vunpack.c.h.b16 %v587
    %v704 = vunpack.c.l.b16 %v588
    %v705 = vunpack.c.h.b16 %v588
    %v706 = vpack.c.b16 %v638, %v634
    %v707 = vpack.c.b16 %v639, %v635
    %v708 = vpack.c.b16 %v640, %v636
    %v709 = vpack.c.b16 %v641, %v637
    %v710 = vpack.c.b16 %v646, %v642
    %v711 = vpack.c.b16 %v647, %v643
    %v712 = vpack.c.b16 %v648, %v644
    %v713 = vpack.c.b16 %v649, %v645
    %v714 = vpack.c.b16 %v654, %v650
    %v715 = vpack.c.b16 %v655, %v651
    %v716 = vpack.c.b16 %v656, %v652
    %v717 = vpack.c.b16 %v657, %v653
    %v718 = vpack.c.b16 %v662, %v658
    %v719 = vpack.c.b16 %v663, %v659
    %v720 = vpack.c.b16 %v664, %v660
    %v721 = vpack.c.b16 %v665, %v661
    %v722 = vpack.c.b16 %v670, %v666
    %v723 = vpack.c.b16 %v671, %v667
    %v724 = vpack.c.b16 %v672, %v668
    %v725 = vpack.c.b16 %v673, %v669
    %v726 = vpack.c.b16 %v678, %v674
    %v727 = vpack.c.b16 %v679, %v675
    %v728 = vpack.c.b16 %v680, %v676
    %v729 = vpack.c.b16 %v681, %v677
    %v730 = vpack.c.b16 %v686, %v682
    %v731 = vpack.c.b16 %v687, %v683
    %v732 = vpack.c.b16 %v688, %v684
    %v733 = vpack.c.b16 %v689, %v685
    %v734 = vpack.c.b16 %v694, %v690
    %v735 = vpack.c.b16 %v695, %v691
    %v736 = vpack.c.b16 %v696, %v692
    %v737 = vpack.c.b16 %v697, %v693
    %v738 = vpack.c.b16 %v702, %v698
    %v739 = vpack.c.b16 %v703, %v699
    %v740 = vpack.c.b16 %v704, %v700
    %v741 = vpack.c.b16 %v705, %v701
    %vm778 = vcmask 130048
    %v780 = vsel %vm778, %v596, 0
    %782 = vmatpush.bf16.msra.mxu0 %v734
    %783 = vmatpush.bf16.msra.mxu0 %v730
    %784 = vmatpush.bf16.msra.mxu0 %v726
    %785 = vmatpush.bf16.msra.mxu0 %v722
    %786 = vmatpush.bf16.msra.mxu0 %v718
    %787 = vmatpush.bf16.msra.mxu0 %v714
    %788 = vmatpush.bf16.msra.mxu0 %v710
    %789 = vmatpush.bf16.msra.mxu0 %v706
    %790 = vmatmul.bf16.gmra.mxu0 %v595
    %v791 = vpop.f32.mrf.mxu0
    %v792 = vadd.f32 0.0, %v791
    %v793 = vpop.f32.mrf.mxu0
    %v794 = vadd.f32 0.0, %v793
    %795 = vdwg.mxu0
    %796 = vmatpush.bf16.msra.mxu0 0
    %797 = vmatpush.bf16.msra.mxu0 0
    %798 = vmatpush.bf16.msra.mxu0 0
    %799 = vmatpush.bf16.msra.mxu0 0
    %800 = vmatpush.bf16.msra.mxu0 0
    %801 = vmatpush.bf16.msra.mxu0 0
    %802 = vmatpush.bf16.msra.mxu0 0
    %803 = vmatpush.bf16.msra.mxu0 %v738
    %804 = vmatmul.bf16.gmra.mxu0 %v780
    %v805 = vpop.f32.mrf.mxu0
    %v806 = vadd.f32 %v792, %v805
    %v807 = vpop.f32.mrf.mxu0
    %v808 = vadd.f32 %v794, %v807
    %809 = vdwg.mxu0
    %810 = vmatpush.bf16.msra.mxu0 %v735
    %811 = vmatpush.bf16.msra.mxu0 %v731
    %812 = vmatpush.bf16.msra.mxu0 %v727
    %813 = vmatpush.bf16.msra.mxu0 %v723
    %814 = vmatpush.bf16.msra.mxu0 %v719
    %815 = vmatpush.bf16.msra.mxu0 %v715
    %816 = vmatpush.bf16.msra.mxu0 %v711
    %817 = vmatpush.bf16.msra.mxu0 %v707
    %818 = vmatmul.bf16.gmra.mxu0 %v595
    %v819 = vpop.f32.mrf.mxu0
    %v820 = vadd.f32 0.0, %v819
    %v821 = vpop.f32.mrf.mxu0
    %v822 = vadd.f32 0.0, %v821
    %823 = vdwg.mxu0
    %824 = vmatpush.bf16.msra.mxu0 0
    %825 = vmatpush.bf16.msra.mxu0 0
    %826 = vmatpush.bf16.msra.mxu0 0
    %827 = vmatpush.bf16.msra.mxu0 0
    %828 = vmatpush.bf16.msra.mxu0 0
    %829 = vmatpush.bf16.msra.mxu0 0
    %830 = vmatpush.bf16.msra.mxu0 0
    %831 = vmatpush.bf16.msra.mxu0 %v739
    %832 = vmatmul.bf16.gmra.mxu0 %v780
    %v833 = vpop.f32.mrf.mxu0
    %v834 = vadd.f32 %v820, %v833
    %v835 = vpop.f32.mrf.mxu0
    %v836 = vadd.f32 %v822, %v835
    %837 = vdwg.mxu0
    %838 = vmatpush.bf16.msra.mxu0 %v736
    %839 = vmatpush.bf16.msra.mxu0 %v732
    %840 = vmatpush.bf16.msra.mxu0 %v728
    %841 = vmatpush.bf16.msra.mxu0 %v724
    %842 = vmatpush.bf16.msra.mxu0 %v720
    %843 = vmatpush.bf16.msra.mxu0 %v716
    %844 = vmatpush.bf16.msra.mxu0 %v712
    %845 = vmatpush.bf16.msra.mxu0 %v708
    %846 = vmatmul.bf16.gmra.mxu0 %v595
    %v847 = vpop.f32.mrf.mxu0
    %v848 = vadd.f32 0.0, %v847
    %v849 = vpop.f32.mrf.mxu0
    %v850 = vadd.f32 0.0, %v849
    %851 = vdwg.mxu0
    %852 = vmatpush.bf16.msra.mxu0 0
    %853 = vmatpush.bf16.msra.mxu0 0
    %854 = vmatpush.bf16.msra.mxu0 0
    %855 = vmatpush.bf16.msra.mxu0 0
    %856 = vmatpush.bf16.msra.mxu0 0
    %857 = vmatpush.bf16.msra.mxu0 0
    %858 = vmatpush.bf16.msra.mxu0 0
    %859 = vmatpush.bf16.msra.mxu0 %v740
    %860 = vmatmul.bf16.gmra.mxu0 %v780
    %v861 = vpop.f32.mrf.mxu0
    %v862 = vadd.f32 %v848, %v861
    %v863 = vpop.f32.mrf.mxu0
    %v864 = vadd.f32 %v850, %v863
    %865 = vdwg.mxu0
    %866 = vmatpush.bf16.msra.mxu0 %v737
    %867 = vmatpush.bf16.msra.mxu0 %v733
    %868 = vmatpush.bf16.msra.mxu0 %v729
    %869 = vmatpush.bf16.msra.mxu0 %v725
    %870 = vmatpush.bf16.msra.mxu0 %v721
    %871 = vmatpush.bf16.msra.mxu0 %v717
    %872 = vmatpush.bf16.msra.mxu0 %v713
    %873 = vmatpush.bf16.msra.mxu0 %v709
    %874 = vmatmul.bf16.gmra.mxu0 %v595
    %v875 = vpop.f32.mrf.mxu0
    %v876 = vadd.f32 0.0, %v875
    %v877 = vpop.f32.mrf.mxu0
    %v878 = vadd.f32 0.0, %v877
    %879 = vdwg.mxu0
    %880 = vmatpush.bf16.msra.mxu0 0
    %881 = vmatpush.bf16.msra.mxu0 0
    %882 = vmatpush.bf16.msra.mxu0 0
    %883 = vmatpush.bf16.msra.mxu0 0
    %884 = vmatpush.bf16.msra.mxu0 0
    %885 = vmatpush.bf16.msra.mxu0 0
    %886 = vmatpush.bf16.msra.mxu0 0
    %887 = vmatpush.bf16.msra.mxu0 %v741
    %888 = vmatmul.bf16.gmra.mxu0 %v780
    %v889 = vpop.f32.mrf.mxu0
    %v890 = vadd.f32 %v876, %v889
    %v891 = vpop.f32.mrf.mxu0
    %v892 = vadd.f32 %v878, %v891
    %893 = vdwg.mxu0
    %v894 = vld [vmem:[%s4] sm:$0xff]
    %v895 = vld [vmem:[%s4 + $0x8] sm:$0xff]
    %v896 = vld [vmem:[%s5] sm:$0xff]
    %v897 = vld [vmem:[%s5 + $0x8] sm:$0xff]
    %898 = vmatpush.msra.mxu0 %v96
    %899 = vmatpush.msra.mxu0 %v95
    %900 = vmatpush.msra.mxu0 %v94
    %901 = vmatpush.msra.mxu0 %v93
    %902 = vmatpush.msra.mxu0 %v92
    %903 = vmatpush.msra.mxu0 %v91
    %904 = vmatpush.msra.mxu0 %v90
    %905 = vmatpush.msra.mxu0 %v89
    %906 = vmatpush.msra.mxu0 %v88
    %907 = vmatpush.msra.mxu0 %v87
    %908 = vmatpush.msra.mxu0 %v86
    %909 = vmatpush.msra.mxu0 %v85
    %910 = vmatpush.msra.mxu0 %v84
    %911 = vmatpush.msra.mxu0 %v83
    %912 = vmatpush.msra.mxu0 %v82
    %913 = vmatpush.msra.mxu0 %v81
    %914 = vmatmul.f32.gmra.mxu0 %v806
    %v915 = vpop.f32.mrf.mxu0
    %v916 = vadd.f32 0.0, %v915
    %917 = vmatmul.f32.gmra.mxu0 %v808
    %v918 = vpop.f32.mrf.mxu0
    %v919 = vadd.f32 0.0, %v918
    %920 = vdwg.mxu0
    %921 = vmatpush.msra.mxu0 %v112
    %922 = vmatpush.msra.mxu0 %v111
    %923 = vmatpush.msra.mxu0 %v110
    %924 = vmatpush.msra.mxu0 %v109
    %925 = vmatpush.msra.mxu0 %v108
    %926 = vmatpush.msra.mxu0 %v107
    %927 = vmatpush.msra.mxu0 %v106
    %928 = vmatpush.msra.mxu0 %v105
    %929 = vmatpush.msra.mxu0 %v104
    %930 = vmatpush.msra.mxu0 %v103
    %931 = vmatpush.msra.mxu0 %v102
    %932 = vmatpush.msra.mxu0 %v101
    %933 = vmatpush.msra.mxu0 %v100
    %934 = vmatpush.msra.mxu0 %v99
    %935 = vmatpush.msra.mxu0 %v98
    %936 = vmatpush.msra.mxu0 %v97
    %937 = vmatmul.f32.gmra.mxu0 %v834
    %v938 = vpop.f32.mrf.mxu0
    %v939 = vadd.f32 %v916, %v938
    %940 = vmatmul.f32.gmra.mxu0 %v836
    %v941 = vpop.f32.mrf.mxu0
    %v942 = vadd.f32 %v919, %v941
    %943 = vdwg.mxu0
    %944 = vmatpush.msra.mxu0 %v128
    %945 = vmatpush.msra.mxu0 %v127
    %946 = vmatpush.msra.mxu0 %v126
    %947 = vmatpush.msra.mxu0 %v125
    %948 = vmatpush.msra.mxu0 %v124
    %949 = vmatpush.msra.mxu0 %v123
    %950 = vmatpush.msra.mxu0 %v122
    %951 = vmatpush.msra.mxu0 %v121
    %952 = vmatpush.msra.mxu0 %v120
    %953 = vmatpush.msra.mxu0 %v119
    %954 = vmatpush.msra.mxu0 %v118
    %955 = vmatpush.msra.mxu0 %v117
    %956 = vmatpush.msra.mxu0 %v116
    %957 = vmatpush.msra.mxu0 %v115
    %958 = vmatpush.msra.mxu0 %v114
    %959 = vmatpush.msra.mxu0 %v113
    %960 = vmatmul.f32.gmra.mxu0 %v862
    %v961 = vpop.f32.mrf.mxu0
    %v962 = vadd.f32 %v939, %v961
    %963 = vmatmul.f32.gmra.mxu0 %v864
    %v964 = vpop.f32.mrf.mxu0
    %v965 = vadd.f32 %v942, %v964
    %966 = vdwg.mxu0
    %967 = vmatpush.msra.mxu0 %v144
    %968 = vmatpush.msra.mxu0 %v143
    %969 = vmatpush.msra.mxu0 %v142
    %970 = vmatpush.msra.mxu0 %v141
    %971 = vmatpush.msra.mxu0 %v140
    %972 = vmatpush.msra.mxu0 %v139
    %973 = vmatpush.msra.mxu0 %v138
    %974 = vmatpush.msra.mxu0 %v137
    %975 = vmatpush.msra.mxu0 %v136
    %976 = vmatpush.msra.mxu0 %v135
    %977 = vmatpush.msra.mxu0 %v134
    %978 = vmatpush.msra.mxu0 %v133
    %979 = vmatpush.msra.mxu0 %v132
    %980 = vmatpush.msra.mxu0 %v131
    %981 = vmatpush.msra.mxu0 %v130
    %982 = vmatpush.msra.mxu0 %v129
    %983 = vmatmul.f32.gmra.mxu0 %v890
    %v984 = vpop.f32.mrf.mxu0
    %v985 = vadd.f32 %v962, %v984
    %986 = vmatmul.f32.gmra.mxu0 %v892
    %v987 = vpop.f32.mrf.mxu0
    %v988 = vadd.f32 %v965, %v987
    %989 = vdwg.mxu0
    %v990 = vmul.f32 %v806, %v806
    %v991 = vmul.f32 %v834, %v834
    %v992 = vmul.f32 %v862, %v862
    %v993 = vmul.f32 %v890, %v890
    %v994 = vmul.f32 %v808, %v808
    %v995 = vmul.f32 %v836, %v836
    %v996 = vmul.f32 %v864, %v864
    %v997 = vmul.f32 %v892, %v892
    %998 = vmatpush.msra.mxu0 %v96
    %999 = vmatpush.msra.mxu0 %v95
    %1000 = vmatpush.msra.mxu0 %v94
    %1001 = vmatpush.msra.mxu0 %v93
    %1002 = vmatpush.msra.mxu0 %v92
    %1003 = vmatpush.msra.mxu0 %v91
    %1004 = vmatpush.msra.mxu0 %v90
    %1005 = vmatpush.msra.mxu0 %v89
    %1006 = vmatpush.msra.mxu0 %v88
    %1007 = vmatpush.msra.mxu0 %v87
    %1008 = vmatpush.msra.mxu0 %v86
    %1009 = vmatpush.msra.mxu0 %v85
    %1010 = vmatpush.msra.mxu0 %v84
    %1011 = vmatpush.msra.mxu0 %v83
    %1012 = vmatpush.msra.mxu0 %v82
    %1013 = vmatpush.msra.mxu0 %v81
    %1014 = vmatmul.f32.gmra.mxu0 %v990
    %v1015 = vpop.f32.mrf.mxu0
    %v1016 = vadd.f32 0.0, %v1015
    %1017 = vmatmul.f32.gmra.mxu0 %v994
    %v1018 = vpop.f32.mrf.mxu0
    %v1019 = vadd.f32 0.0, %v1018
    %1020 = vdwg.mxu0
    %1021 = vmatpush.msra.mxu0 %v112
    %1022 = vmatpush.msra.mxu0 %v111
    %1023 = vmatpush.msra.mxu0 %v110
    %1024 = vmatpush.msra.mxu0 %v109
    %1025 = vmatpush.msra.mxu0 %v108
    %1026 = vmatpush.msra.mxu0 %v107
    %1027 = vmatpush.msra.mxu0 %v106
    %1028 = vmatpush.msra.mxu0 %v105
    %1029 = vmatpush.msra.mxu0 %v104
    %1030 = vmatpush.msra.mxu0 %v103
    %1031 = vmatpush.msra.mxu0 %v102
    %1032 = vmatpush.msra.mxu0 %v101
    %1033 = vmatpush.msra.mxu0 %v100
    %1034 = vmatpush.msra.mxu0 %v99
    %1035 = vmatpush.msra.mxu0 %v98
    %1036 = vmatpush.msra.mxu0 %v97
    %1037 = vmatmul.f32.gmra.mxu0 %v991
    %v1038 = vpop.f32.mrf.mxu0
    %v1039 = vadd.f32 %v1016, %v1038
    %1040 = vmatmul.f32.gmra.mxu0 %v995
    %v1041 = vpop.f32.mrf.mxu0
    %v1042 = vadd.f32 %v1019, %v1041
    %1043 = vdwg.mxu0
    %1044 = vmatpush.msra.mxu0 %v128
    %1045 = vmatpush.msra.mxu0 %v127
    %1046 = vmatpush.msra.mxu0 %v126
    %1047 = vmatpush.msra.mxu0 %v125
    %1048 = vmatpush.msra.mxu0 %v124
    %1049 = vmatpush.msra.mxu0 %v123
    %1050 = vmatpush.msra.mxu0 %v122
    %1051 = vmatpush.msra.mxu0 %v121
    %1052 = vmatpush.msra.mxu0 %v120
    %1053 = vmatpush.msra.mxu0 %v119
    %1054 = vmatpush.msra.mxu0 %v118
    %1055 = vmatpush.msra.mxu0 %v117
    %1056 = vmatpush.msra.mxu0 %v116
    %1057 = vmatpush.msra.mxu0 %v115
    %1058 = vmatpush.msra.mxu0 %v114
    %1059 = vmatpush.msra.mxu0 %v113
    %1060 = vmatmul.f32.gmra.mxu0 %v992
    %v1061 = vpop.f32.mrf.mxu0
    %v1062 = vadd.f32 %v1039, %v1061
    %1063 = vmatmul.f32.gmra.mxu0 %v996
    %v1064 = vpop.f32.mrf.mxu0
    %v1065 = vadd.f32 %v1042, %v1064
    %1066 = vdwg.mxu0
    %1067 = vmatpush.msra.mxu0 %v144
    %1068 = vmatpush.msra.mxu0 %v143
    %1069 = vmatpush.msra.mxu0 %v142
    %1070 = vmatpush.msra.mxu0 %v141
    %1071 = vmatpush.msra.mxu0 %v140
    %1072 = vmatpush.msra.mxu0 %v139
    %1073 = vmatpush.msra.mxu0 %v138
    %1074 = vmatpush.msra.mxu0 %v137
    %1075 = vmatpush.msra.mxu0 %v136
    %1076 = vmatpush.msra.mxu0 %v135
    %1077 = vmatpush.msra.mxu0 %v134
    %1078 = vmatpush.msra.mxu0 %v133
    %1079 = vmatpush.msra.mxu0 %v132
    %1080 = vmatpush.msra.mxu0 %v131
    %1081 = vmatpush.msra.mxu0 %v130
    %1082 = vmatpush.msra.mxu0 %v129
    %1083 = vmatmul.f32.gmra.mxu0 %v993
    %v1084 = vpop.f32.mrf.mxu0
    %v1085 = vadd.f32 %v1062, %v1084
    %1086 = vmatmul.f32.gmra.mxu0 %v997
    %v1087 = vpop.f32.mrf.mxu0
    %v1088 = vadd.f32 %v1065, %v1087
    %1089 = vdwg.mxu0
    %v1090 = vmul.f32 %v985, 0.001953125
    %v1091 = vmul.f32 %v988, 0.001953125
    %v1092 = vmul.f32 %v1085, 0.001953125
    %v1093 = vmul.f32 %v1088, 0.001953125
    %v1094 = vmul.f32 %v1090, %v1090
    %v1095 = vmul.f32 %v1091, %v1091
    %v1096 = vsub.f32 %v1092, %v1094
    %v1097 = vsub.f32 %v1093, %v1095
    %v1098 = vadd.f32 %v1096, 1e-05
    %v1099 = vadd.f32 %v1097, 1e-05
    %v1100 = vrsqrt.pop %v1098
    %v1101 = vmul.f32 %v1100, %v1098
    %v1102 = vmul.f32 %v1101, %v1100
    %v1103 = vmul.f32 0.5, %v1102
    %v1104 = vsub.f32 1.5, %v1103
    %v1105 = vmul.f32 %v1100, %v1104
    %vm1106 = vweird.f32 %v1098
    %vm1107 = vweird.f32 %v1100
    %vm1108 = vmor %vm1106, %vm1107
    %v1109 = vsel %vm1108, %v1100, %v1105
    %v1110 = vrsqrt.pop %v1099
    %v1111 = vmul.f32 %v1110, %v1099
    %v1112 = vmul.f32 %v1111, %v1110
    %v1113 = vmul.f32 0.5, %v1112
    %v1114 = vsub.f32 1.5, %v1113
    %v1115 = vmul.f32 %v1110, %v1114
    %vm1116 = vweird.f32 %v1099
    %vm1117 = vweird.f32 %v1110
    %vm1118 = vmor %vm1116, %vm1117
    %v1119 = vsel %vm1118, %v1110, %v1115
    %v1120 = vmul.f32 %v894, %v1109
    %v1121 = vmul.f32 %v895, %v1119
    %1123 = vset.pattern.permute.xlu0 0
    %1124 = vperm.xlu0 %1123, %v1120
    %v1125 = vpop.permute.xlu0 %1124
    %1128 = vset.pattern.permute.xlu0 0
    %1129 = vperm.xlu0 %1128, %v1121
    %v1130 = vpop.permute.xlu0 %1129
    %v1132 = vmul.f32 %v806, %v1125
    %v1133 = vmul.f32 %v834, %v1125
    %v1134 = vmul.f32 %v862, %v1125
    %v1135 = vmul.f32 %v890, %v1125
    %v1136 = vmul.f32 %v808, %v1130
    %v1137 = vmul.f32 %v836, %v1130
    %v1138 = vmul.f32 %v864, %v1130
    %v1139 = vmul.f32 %v892, %v1130
    %v1140 = vmul.f32 %v1090, %v1120
    %v1141 = vmul.f32 %v1091, %v1121
    %v1142 = vsub.f32 %v896, %v1140
    %v1143 = vsub.f32 %v897, %v1141
    %1145 = vset.pattern.permute.xlu0 0
    %1146 = vperm.xlu0 %1145, %v1142
    %v1147 = vpop.permute.xlu0 %1146
    %1150 = vset.pattern.permute.xlu0 0
    %1151 = vperm.xlu0 %1150, %v1143
    %v1152 = vpop.permute.xlu0 %1151
    %v1154 = vadd.f32 %v1132, %v1147
    %v1155 = vadd.f32 %v1133, %v1147
    %v1156 = vadd.f32 %v1134, %v1147
    %v1157 = vadd.f32 %v1135, %v1147
    %v1158 = vadd.f32 %v1136, %v1152
    %v1159 = vadd.f32 %v1137, %v1152
    %v1160 = vadd.f32 %v1138, %v1152
    %v1161 = vadd.f32 %v1139, %v1152
    %v1162 = vmax.f32 %v1154, 0.0
    %v1163 = vmax.f32 %v1155, 0.0
    %v1164 = vmax.f32 %v1156, 0.0
    %v1165 = vmax.f32 %v1157, 0.0
    %v1166 = vmax.f32 %v1158, 0.0
    %v1167 = vmax.f32 %v1159, 0.0
    %v1168 = vmax.f32 %v1160, 0.0
    %v1169 = vmax.f32 %v1161, 0.0
    %1170 = vrot.lane.b32.xlu0 %v1162, 16
    %v1171 = vpop.permute.xlu0 %1170
    %1172 = vrot.lane.b32.xlu0 %v1166, 16
    %v1173 = vpop.permute.xlu0 %1172
    %1174 = vrot.lane.b32.xlu0 %v1163, 16
    %v1175 = vpop.permute.xlu0 %1174
    %1176 = vrot.lane.b32.xlu0 %v1167, 16
    %v1177 = vpop.permute.xlu0 %1176
    %1178 = vrot.lane.b32.xlu0 %v1164, 16
    %v1179 = vpop.permute.xlu0 %1178
    %1180 = vrot.lane.b32.xlu0 %v1168, 16
    %v1181 = vpop.permute.xlu0 %1180
    %1182 = vrot.lane.b32.xlu0 %v1165, 16
    %v1183 = vpop.permute.xlu0 %1182
    %1184 = vrot.lane.b32.xlu0 %v1169, 16
    %v1185 = vpop.permute.xlu0 %1184
    %v1186 = vsel %vm171, %v1179, %v1183
    %v1187 = vsel %vm171, %v1181, %v1185
    %v1188 = vsel %vm171, %v1175, %v1179
    %v1189 = vsel %vm171, %v1177, %v1181
    %v1190 = vsel %vm171, %v1171, %v1175
    %v1191 = vsel %vm171, %v1173, %v1177
    %v1192 = vsel %vm171, %v1183, %v1171
    %v1193 = vsel %vm171, %v1185, %v1173
    %1194 = vrot.lane.b32.xlu0 %v1162, 112
    %v1195 = vpop.permute.xlu0 %1194
    %1196 = vrot.lane.b32.xlu0 %v1166, 112
    %v1197 = vpop.permute.xlu0 %1196
    %1198 = vrot.lane.b32.xlu0 %v1163, 112
    %v1199 = vpop.permute.xlu0 %1198
    %1200 = vrot.lane.b32.xlu0 %v1167, 112
    %v1201 = vpop.permute.xlu0 %1200
    %1202 = vrot.lane.b32.xlu0 %v1164, 112
    %v1203 = vpop.permute.xlu0 %1202
    %1204 = vrot.lane.b32.xlu0 %v1168, 112
    %v1205 = vpop.permute.xlu0 %1204
    %1206 = vrot.lane.b32.xlu0 %v1165, 112
    %v1207 = vpop.permute.xlu0 %1206
    %1208 = vrot.lane.b32.xlu0 %v1169, 112
    %v1209 = vpop.permute.xlu0 %1208
    %v1210 = vsel %vm196, %v1203, %v1207
    %v1211 = vsel %vm196, %v1205, %v1209
    %v1212 = vsel %vm196, %v1199, %v1203
    %v1213 = vsel %vm196, %v1201, %v1205
    %v1214 = vsel %vm196, %v1195, %v1199
    %v1215 = vsel %vm196, %v1197, %v1201
    %v1216 = vsel %vm196, %v1207, %v1195
    %v1217 = vsel %vm196, %v1209, %v1197
    %1218 = vrot.lane.b32.xlu0 %v1192, 1
    %v1219 = vpop.permute.xlu0 %1218
    %1220 = vrot.lane.b32.xlu0 %v1193, 1
    %v1221 = vpop.permute.xlu0 %1220
    %1222 = vrot.lane.b32.xlu0 %v1190, 1
    %v1223 = vpop.permute.xlu0 %1222
    %1224 = vrot.lane.b32.xlu0 %v1191, 1
    %v1225 = vpop.permute.xlu0 %1224
    %1226 = vrot.lane.b32.xlu0 %v1188, 1
    %v1227 = vpop.permute.xlu0 %1226
    %1228 = vrot.lane.b32.xlu0 %v1189, 1
    %v1229 = vpop.permute.xlu0 %1228
    %1230 = vrot.lane.b32.xlu0 %v1186, 1
    %v1231 = vpop.permute.xlu0 %1230
    %1232 = vrot.lane.b32.xlu0 %v1187, 1
    %v1233 = vpop.permute.xlu0 %1232
    %v1234 = vsel %vm221, %v1227, %v1231
    %v1235 = vsel %vm221, %v1229, %v1233
    %v1236 = vsel %vm221, %v1223, %v1227
    %v1237 = vsel %vm221, %v1225, %v1229
    %v1238 = vsel %vm221, %v1219, %v1223
    %v1239 = vsel %vm221, %v1221, %v1225
    %v1240 = vsel %vm221, %v1231, %v1219
    %v1241 = vsel %vm221, %v1233, %v1221
    %v1242 = vld [vmem:[%s1] sm:$0xff]
    %v1243 = vld [vmem:[%s1 + $0x8] sm:$0xff]
    %v1244 = vld [vmem:[%s1 + $0x10] sm:$0xff]
    %v1245 = vld [vmem:[%s1 + $0x18] sm:$0xff]
    %v1246 = vld [vmem:[%s1 + $0x20] sm:$0xff]
    %v1247 = vld [vmem:[%s1 + $0x28] sm:$0xff]
    %v1248 = vld [vmem:[%s1 + $0x30] sm:$0xff]
    %v1249 = vld [vmem:[%s1 + $0x38] sm:$0xff]
    %v1250 = vmul.f32 %v1240, %v1242
    %v1251 = vmul.f32 %v1238, %v1243
    %v1252 = vmul.f32 %v1236, %v1244
    %v1253 = vmul.f32 %v1234, %v1245
    %v1254 = vmul.f32 %v1241, %v1246
    %v1255 = vmul.f32 %v1239, %v1247
    %v1256 = vmul.f32 %v1237, %v1248
    %v1257 = vmul.f32 %v1235, %v1249
    %v1258 = vpack.c.bf16 %v1251, %v1250
    %v1259 = vpack.c.bf16 %v1253, %v1252
    %v1260 = vpack.c.bf16 %v1255, %v1254
    %v1261 = vpack.c.bf16 %v1257, %v1256
    %1262 = vst [vmem:[#allocation2] sm:$0xff] %v1258
    %1263 = vst [vmem:[#allocation2 + $0x8] sm:$0xff] %v1259
    %1264 = vst [vmem:[#allocation2 + $0x10] sm:$0xff] %v1260
    %1265 = vst [vmem:[#allocation2 + $0x18] sm:$0xff] %v1261
    %v1266 = vld [vmem:[%s1 + $0x40] sm:$0xff]
    %v1267 = vld [vmem:[%s1 + $0x48] sm:$0xff]
    %v1268 = vld [vmem:[%s1 + $0x50] sm:$0xff]
    %v1269 = vld [vmem:[%s1 + $0x58] sm:$0xff]
    %v1270 = vld [vmem:[%s1 + $0x60] sm:$0xff]
    %v1271 = vld [vmem:[%s1 + $0x68] sm:$0xff]
    %v1272 = vld [vmem:[%s1 + $0x70] sm:$0xff]
    %v1273 = vld [vmem:[%s1 + $0x78] sm:$0xff]
    %v1274 = vmul.f32 %v1192, %v1266
    %v1275 = vmul.f32 %v1190, %v1267
    %v1276 = vmul.f32 %v1188, %v1268
    %v1277 = vmul.f32 %v1186, %v1269
    %v1278 = vmul.f32 %v1193, %v1270
    %v1279 = vmul.f32 %v1191, %v1271
    %v1280 = vmul.f32 %v1189, %v1272
    %v1281 = vmul.f32 %v1187, %v1273
    %v1282 = vpack.c.bf16 %v1275, %v1274
    %v1283 = vpack.c.bf16 %v1277, %v1276
    %v1284 = vpack.c.bf16 %v1279, %v1278
    %v1285 = vpack.c.bf16 %v1281, %v1280
    %1286 = vst [vmem:[#allocation2 + $0x20] sm:$0xff] %v1282
    %1287 = vst [vmem:[#allocation2 + $0x28] sm:$0xff] %v1283
    %1288 = vst [vmem:[#allocation2 + $0x30] sm:$0xff] %v1284
    %1289 = vst [vmem:[#allocation2 + $0x38] sm:$0xff] %v1285
    %1290 = vrot.lane.b32.xlu0 %v1192, 127
    %v1291 = vpop.permute.xlu0 %1290
    %1292 = vrot.lane.b32.xlu0 %v1193, 127
    %v1293 = vpop.permute.xlu0 %1292
    %1294 = vrot.lane.b32.xlu0 %v1190, 127
    %v1295 = vpop.permute.xlu0 %1294
    %1296 = vrot.lane.b32.xlu0 %v1191, 127
    %v1297 = vpop.permute.xlu0 %1296
    %1298 = vrot.lane.b32.xlu0 %v1188, 127
    %v1299 = vpop.permute.xlu0 %1298
    %1300 = vrot.lane.b32.xlu0 %v1189, 127
    %v1301 = vpop.permute.xlu0 %1300
    %1302 = vrot.lane.b32.xlu0 %v1186, 127
    %v1303 = vpop.permute.xlu0 %1302
    %1304 = vrot.lane.b32.xlu0 %v1187, 127
    %v1305 = vpop.permute.xlu0 %1304
    %v1306 = vsel %vm294, %v1299, %v1303
    %v1307 = vsel %vm294, %v1301, %v1305
    %v1308 = vsel %vm294, %v1295, %v1299
    %v1309 = vsel %vm294, %v1297, %v1301
    %v1310 = vsel %vm294, %v1291, %v1295
    %v1311 = vsel %vm294, %v1293, %v1297
    %v1312 = vsel %vm294, %v1303, %v1291
    %v1313 = vsel %vm294, %v1305, %v1293
    %v1314 = vld [vmem:[%s1 + $0x80] sm:$0xff]
    %v1315 = vld [vmem:[%s1 + $0x88] sm:$0xff]
    %v1316 = vld [vmem:[%s1 + $0x90] sm:$0xff]
    %v1317 = vld [vmem:[%s1 + $0x98] sm:$0xff]
    %v1318 = vld [vmem:[%s1 + $0xa0] sm:$0xff]
    %v1319 = vld [vmem:[%s1 + $0xa8] sm:$0xff]
    %v1320 = vld [vmem:[%s1 + $0xb0] sm:$0xff]
    %v1321 = vld [vmem:[%s1 + $0xb8] sm:$0xff]
    %v1322 = vmul.f32 %v1310, %v1314
    %v1323 = vmul.f32 %v1308, %v1315
    %v1324 = vmul.f32 %v1306, %v1316
    %v1325 = vmul.f32 %v1312, %v1317
    %v1326 = vmul.f32 %v1311, %v1318
    %v1327 = vmul.f32 %v1309, %v1319
    %v1328 = vmul.f32 %v1307, %v1320
    %v1329 = vmul.f32 %v1313, %v1321
    %v1330 = vpack.c.bf16 %v1323, %v1322
    %v1331 = vpack.c.bf16 %v1325, %v1324
    %v1332 = vpack.c.bf16 %v1327, %v1326
    %v1333 = vpack.c.bf16 %v1329, %v1328
    %1334 = vst [vmem:[#allocation2 + $0x40] sm:$0xff] %v1330
    %1335 = vst [vmem:[#allocation2 + $0x48] sm:$0xff] %v1331
    %1336 = vst [vmem:[#allocation2 + $0x50] sm:$0xff] %v1332
    %1337 = vst [vmem:[#allocation2 + $0x58] sm:$0xff] %v1333
    %1338 = vrot.lane.b32.xlu0 %v1162, 1
    %v1339 = vpop.permute.xlu0 %1338
    %1340 = vrot.lane.b32.xlu0 %v1166, 1
    %v1341 = vpop.permute.xlu0 %1340
    %1342 = vrot.lane.b32.xlu0 %v1163, 1
    %v1343 = vpop.permute.xlu0 %1342
    %1344 = vrot.lane.b32.xlu0 %v1167, 1
    %v1345 = vpop.permute.xlu0 %1344
    %1346 = vrot.lane.b32.xlu0 %v1164, 1
    %v1347 = vpop.permute.xlu0 %1346
    %1348 = vrot.lane.b32.xlu0 %v1168, 1
    %v1349 = vpop.permute.xlu0 %1348
    %1350 = vrot.lane.b32.xlu0 %v1165, 1
    %v1351 = vpop.permute.xlu0 %1350
    %1352 = vrot.lane.b32.xlu0 %v1169, 1
    %v1353 = vpop.permute.xlu0 %1352
    %v1354 = vsel %vm221, %v1347, %v1351
    %v1355 = vsel %vm221, %v1349, %v1353
    %v1356 = vsel %vm221, %v1343, %v1347
    %v1357 = vsel %vm221, %v1345, %v1349
    %v1358 = vsel %vm221, %v1339, %v1343
    %v1359 = vsel %vm221, %v1341, %v1345
    %v1360 = vsel %vm221, %v1351, %v1339
    %v1361 = vsel %vm221, %v1353, %v1341
    %v1362 = vld [vmem:[%s1 + $0xc0] sm:$0xff]
    %v1363 = vld [vmem:[%s1 + $0xc8] sm:$0xff]
    %v1364 = vld [vmem:[%s1 + $0xd0] sm:$0xff]
    %v1365 = vld [vmem:[%s1 + $0xd8] sm:$0xff]
    %v1366 = vld [vmem:[%s1 + $0xe0] sm:$0xff]
    %v1367 = vld [vmem:[%s1 + $0xe8] sm:$0xff]
    %v1368 = vld [vmem:[%s1 + $0xf0] sm:$0xff]
    %v1369 = vld [vmem:[%s1 + $0xf8] sm:$0xff]
    %v1370 = vmul.f32 %v1360, %v1362
    %v1371 = vmul.f32 %v1358, %v1363
    %v1372 = vmul.f32 %v1356, %v1364
    %v1373 = vmul.f32 %v1354, %v1365
    %v1374 = vmul.f32 %v1361, %v1366
    %v1375 = vmul.f32 %v1359, %v1367
    %v1376 = vmul.f32 %v1357, %v1368
    %v1377 = vmul.f32 %v1355, %v1369
    %v1378 = vpack.c.bf16 %v1371, %v1370
    %v1379 = vpack.c.bf16 %v1373, %v1372
    %v1380 = vpack.c.bf16 %v1375, %v1374
    %v1381 = vpack.c.bf16 %v1377, %v1376
    %1382 = vst [vmem:[#allocation2 + $0x60] sm:$0xff] %v1378
    %1383 = vst [vmem:[#allocation2 + $0x68] sm:$0xff] %v1379
    %1384 = vst [vmem:[#allocation2 + $0x70] sm:$0xff] %v1380
    %1385 = vst [vmem:[#allocation2 + $0x78] sm:$0xff] %v1381
    %v1386 = vpack.c.bf16 %v1163, %v1162
    %v1387 = vpack.c.bf16 %v1165, %v1164
    %v1388 = vpack.c.bf16 %v1167, %v1166
    %v1389 = vpack.c.bf16 %v1169, %v1168
    %1390 = vst [vmem:[#allocation2 + $0x80] sm:$0xff] %v1386
    %1391 = vst [vmem:[#allocation2 + $0x88] sm:$0xff] %v1387
    %1392 = vst [vmem:[#allocation2 + $0x90] sm:$0xff] %v1388
    %1393 = vst [vmem:[#allocation2 + $0x98] sm:$0xff] %v1389
    %1394 = vrot.lane.b32.xlu0 %v1162, 127
    %v1395 = vpop.permute.xlu0 %1394
    %1396 = vrot.lane.b32.xlu0 %v1166, 127
    %v1397 = vpop.permute.xlu0 %1396
    %1398 = vrot.lane.b32.xlu0 %v1163, 127
    %v1399 = vpop.permute.xlu0 %1398
    %1400 = vrot.lane.b32.xlu0 %v1167, 127
    %v1401 = vpop.permute.xlu0 %1400
    %1402 = vrot.lane.b32.xlu0 %v1164, 127
    %v1403 = vpop.permute.xlu0 %1402
    %1404 = vrot.lane.b32.xlu0 %v1168, 127
    %v1405 = vpop.permute.xlu0 %1404
    %1406 = vrot.lane.b32.xlu0 %v1165, 127
    %v1407 = vpop.permute.xlu0 %1406
    %1408 = vrot.lane.b32.xlu0 %v1169, 127
    %v1409 = vpop.permute.xlu0 %1408
    %v1410 = vsel %vm294, %v1403, %v1407
    %v1411 = vsel %vm294, %v1405, %v1409
    %v1412 = vsel %vm294, %v1399, %v1403
    %v1413 = vsel %vm294, %v1401, %v1405
    %v1414 = vsel %vm294, %v1395, %v1399
    %v1415 = vsel %vm294, %v1397, %v1401
    %v1416 = vsel %vm294, %v1407, %v1395
    %v1417 = vsel %vm294, %v1409, %v1397
    %v1418 = vld [vmem:[%s1 + $0x140] sm:$0xff]
    %v1419 = vld [vmem:[%s1 + $0x148] sm:$0xff]
    %v1420 = vld [vmem:[%s1 + $0x150] sm:$0xff]
    %v1421 = vld [vmem:[%s1 + $0x158] sm:$0xff]
    %v1422 = vld [vmem:[%s1 + $0x160] sm:$0xff]
    %v1423 = vld [vmem:[%s1 + $0x168] sm:$0xff]
    %v1424 = vld [vmem:[%s1 + $0x170] sm:$0xff]
    %v1425 = vld [vmem:[%s1 + $0x178] sm:$0xff]
    %v1426 = vmul.f32 %v1414, %v1418
    %v1427 = vmul.f32 %v1412, %v1419
    %v1428 = vmul.f32 %v1410, %v1420
    %v1429 = vmul.f32 %v1416, %v1421
    %v1430 = vmul.f32 %v1415, %v1422
    %v1431 = vmul.f32 %v1413, %v1423
    %v1432 = vmul.f32 %v1411, %v1424
    %v1433 = vmul.f32 %v1417, %v1425
    %v1434 = vpack.c.bf16 %v1427, %v1426
    %v1435 = vpack.c.bf16 %v1429, %v1428
    %v1436 = vpack.c.bf16 %v1431, %v1430
    %v1437 = vpack.c.bf16 %v1433, %v1432
    %1438 = vst [vmem:[#allocation2 + $0xa0] sm:$0xff] %v1434
    %1439 = vst [vmem:[#allocation2 + $0xa8] sm:$0xff] %v1435
    %1440 = vst [vmem:[#allocation2 + $0xb0] sm:$0xff] %v1436
    %1441 = vst [vmem:[#allocation2 + $0xb8] sm:$0xff] %v1437
    %1442 = vrot.lane.b32.xlu0 %v1214, 1
    %v1443 = vpop.permute.xlu0 %1442
    %1444 = vrot.lane.b32.xlu0 %v1215, 1
    %v1445 = vpop.permute.xlu0 %1444
    %1446 = vrot.lane.b32.xlu0 %v1212, 1
    %v1447 = vpop.permute.xlu0 %1446
    %1448 = vrot.lane.b32.xlu0 %v1213, 1
    %v1449 = vpop.permute.xlu0 %1448
    %1450 = vrot.lane.b32.xlu0 %v1210, 1
    %v1451 = vpop.permute.xlu0 %1450
    %1452 = vrot.lane.b32.xlu0 %v1211, 1
    %v1453 = vpop.permute.xlu0 %1452
    %1454 = vrot.lane.b32.xlu0 %v1216, 1
    %v1455 = vpop.permute.xlu0 %1454
    %1456 = vrot.lane.b32.xlu0 %v1217, 1
    %v1457 = vpop.permute.xlu0 %1456
    %v1458 = vsel %vm221, %v1451, %v1455
    %v1459 = vsel %vm221, %v1453, %v1457
    %v1460 = vsel %vm221, %v1447, %v1451
    %v1461 = vsel %vm221, %v1449, %v1453
    %v1462 = vsel %vm221, %v1443, %v1447
    %v1463 = vsel %vm221, %v1445, %v1449
    %v1464 = vsel %vm221, %v1455, %v1443
    %v1465 = vsel %vm221, %v1457, %v1445
    %v1466 = vld [vmem:[%s1 + $0x180] sm:$0xff]
    %v1467 = vld [vmem:[%s1 + $0x188] sm:$0xff]
    %v1468 = vld [vmem:[%s1 + $0x190] sm:$0xff]
    %v1469 = vld [vmem:[%s1 + $0x198] sm:$0xff]
    %v1470 = vld [vmem:[%s1 + $0x1a0] sm:$0xff]
    %v1471 = vld [vmem:[%s1 + $0x1a8] sm:$0xff]
    %v1472 = vld [vmem:[%s1 + $0x1b0] sm:$0xff]
    %v1473 = vld [vmem:[%s1 + $0x1b8] sm:$0xff]
    %v1474 = vmul.f32 %v1464, %v1466
    %v1475 = vmul.f32 %v1462, %v1467
    %v1476 = vmul.f32 %v1460, %v1468
    %v1477 = vmul.f32 %v1458, %v1469
    %v1478 = vmul.f32 %v1465, %v1470
    %v1479 = vmul.f32 %v1463, %v1471
    %v1480 = vmul.f32 %v1461, %v1472
    %v1481 = vmul.f32 %v1459, %v1473
    %v1482 = vpack.c.bf16 %v1475, %v1474
    %v1483 = vpack.c.bf16 %v1477, %v1476
    %v1484 = vpack.c.bf16 %v1479, %v1478
    %v1485 = vpack.c.bf16 %v1481, %v1480
    %1486 = vst [vmem:[#allocation2 + $0xc0] sm:$0xff] %v1482
    %1487 = vst [vmem:[#allocation2 + $0xc8] sm:$0xff] %v1483
    %1488 = vst [vmem:[#allocation2 + $0xd0] sm:$0xff] %v1484
    %1489 = vst [vmem:[#allocation2 + $0xd8] sm:$0xff] %v1485
    %v1490 = vld [vmem:[%s1 + $0x1c0] sm:$0xff]
    %v1491 = vld [vmem:[%s1 + $0x1c8] sm:$0xff]
    %v1492 = vld [vmem:[%s1 + $0x1d0] sm:$0xff]
    %v1493 = vld [vmem:[%s1 + $0x1d8] sm:$0xff]
    %v1494 = vld [vmem:[%s1 + $0x1e0] sm:$0xff]
    %v1495 = vld [vmem:[%s1 + $0x1e8] sm:$0xff]
    %v1496 = vld [vmem:[%s1 + $0x1f0] sm:$0xff]
    %v1497 = vld [vmem:[%s1 + $0x1f8] sm:$0xff]
    %v1498 = vmul.f32 %v1214, %v1490
    %v1499 = vmul.f32 %v1212, %v1491
    %v1500 = vmul.f32 %v1210, %v1492
    %v1501 = vmul.f32 %v1216, %v1493
    %v1502 = vmul.f32 %v1215, %v1494
    %v1503 = vmul.f32 %v1213, %v1495
    %v1504 = vmul.f32 %v1211, %v1496
    %v1505 = vmul.f32 %v1217, %v1497
    %v1506 = vpack.c.bf16 %v1499, %v1498
    %v1507 = vpack.c.bf16 %v1501, %v1500
    %v1508 = vpack.c.bf16 %v1503, %v1502
    %v1509 = vpack.c.bf16 %v1505, %v1504
    %1510 = vst [vmem:[#allocation2 + $0xe0] sm:$0xff] %v1506
    %1511 = vst [vmem:[#allocation2 + $0xe8] sm:$0xff] %v1507
    %1512 = vst [vmem:[#allocation2 + $0xf0] sm:$0xff] %v1508
    %1513 = vst [vmem:[#allocation2 + $0xf8] sm:$0xff] %v1509
    %1514 = vrot.lane.b32.xlu0 %v1214, 127
    %v1515 = vpop.permute.xlu0 %1514
    %1516 = vrot.lane.b32.xlu0 %v1215, 127
    %v1517 = vpop.permute.xlu0 %1516
    %1518 = vrot.lane.b32.xlu0 %v1212, 127
    %v1519 = vpop.permute.xlu0 %1518
    %1520 = vrot.lane.b32.xlu0 %v1213, 127
    %v1521 = vpop.permute.xlu0 %1520
    %1522 = vrot.lane.b32.xlu0 %v1210, 127
    %v1523 = vpop.permute.xlu0 %1522
    %1524 = vrot.lane.b32.xlu0 %v1211, 127
    %v1525 = vpop.permute.xlu0 %1524
    %1526 = vrot.lane.b32.xlu0 %v1216, 127
    %v1527 = vpop.permute.xlu0 %1526
    %1528 = vrot.lane.b32.xlu0 %v1217, 127
    %v1529 = vpop.permute.xlu0 %1528
    %v1530 = vsel %vm294, %v1523, %v1527
    %v1531 = vsel %vm294, %v1525, %v1529
    %v1532 = vsel %vm294, %v1519, %v1523
    %v1533 = vsel %vm294, %v1521, %v1525
    %v1534 = vsel %vm294, %v1515, %v1519
    %v1535 = vsel %vm294, %v1517, %v1521
    %v1536 = vsel %vm294, %v1527, %v1515
    %v1537 = vsel %vm294, %v1529, %v1517
    %v1538 = vld [vmem:[%s1 + $0x200] sm:$0xff]
    %v1539 = vld [vmem:[%s1 + $0x208] sm:$0xff]
    %v1540 = vld [vmem:[%s1 + $0x210] sm:$0xff]
    %v1541 = vld [vmem:[%s1 + $0x218] sm:$0xff]
    %v1542 = vld [vmem:[%s1 + $0x220] sm:$0xff]
    %v1543 = vld [vmem:[%s1 + $0x228] sm:$0xff]
    %v1544 = vld [vmem:[%s1 + $0x230] sm:$0xff]
    %v1545 = vld [vmem:[%s1 + $0x238] sm:$0xff]
    %v1546 = vmul.f32 %v1534, %v1538
    %v1547 = vmul.f32 %v1532, %v1539
    %v1548 = vmul.f32 %v1530, %v1540
    %v1549 = vmul.f32 %v1536, %v1541
    %v1550 = vmul.f32 %v1535, %v1542
    %v1551 = vmul.f32 %v1533, %v1543
    %v1552 = vmul.f32 %v1531, %v1544
    %v1553 = vmul.f32 %v1537, %v1545
    %v1554 = vpack.c.bf16 %v1547, %v1546
    %v1555 = vpack.c.bf16 %v1549, %v1548
    %v1556 = vpack.c.bf16 %v1551, %v1550
    %v1557 = vpack.c.bf16 %v1553, %v1552
    %1558 = vst [vmem:[#allocation2 + $0x100] sm:$0xff] %v1554
    %1559 = vst [vmem:[#allocation2 + $0x108] sm:$0xff] %v1555
    %1560 = vst [vmem:[#allocation2 + $0x110] sm:$0xff] %v1556
    %1561 = vst [vmem:[#allocation2 + $0x118] sm:$0xff] %v1557
    %v1562 = vld [vmem:[#allocation8] sm:$0xff]
    %v1563 = vld [vmem:[#allocation8 + $0x8] sm:$0xff]
    %v1564 = vld [vmem:[#allocation2] sm:$0xff]
    %v1565 = vld [vmem:[#allocation2 + $0x8] sm:$0xff]
    %v1566 = vld [vmem:[#allocation2 + $0x10] sm:$0xff]
    %v1567 = vld [vmem:[#allocation2 + $0x18] sm:$0xff]
    %v1568 = vld [vmem:[#allocation2 + $0x20] sm:$0xff]
    %v1569 = vld [vmem:[#allocation2 + $0x28] sm:$0xff]
    %v1570 = vld [vmem:[#allocation2 + $0x30] sm:$0xff]
    %v1571 = vld [vmem:[#allocation2 + $0x38] sm:$0xff]
    %v1572 = vld [vmem:[#allocation2 + $0x40] sm:$0xff]
    %v1573 = vld [vmem:[#allocation2 + $0x48] sm:$0xff]
    %v1574 = vld [vmem:[#allocation2 + $0x50] sm:$0xff]
    %v1575 = vld [vmem:[#allocation2 + $0x58] sm:$0xff]
    %v1576 = vld [vmem:[#allocation2 + $0x60] sm:$0xff]
    %v1577 = vld [vmem:[#allocation2 + $0x68] sm:$0xff]
    %v1578 = vld [vmem:[#allocation2 + $0x70] sm:$0xff]
    %v1579 = vld [vmem:[#allocation2 + $0x78] sm:$0xff]
    %v1580 = vld [vmem:[#allocation2 + $0x80] sm:$0xff]
    %v1581 = vld [vmem:[#allocation2 + $0x88] sm:$0xff]
    %v1582 = vld [vmem:[#allocation2 + $0x90] sm:$0xff]
    %v1583 = vld [vmem:[#allocation2 + $0x98] sm:$0xff]
    %v1584 = vld [vmem:[#allocation2 + $0xa0] sm:$0xff]
    %v1585 = vld [vmem:[#allocation2 + $0xa8] sm:$0xff]
    %v1586 = vld [vmem:[#allocation2 + $0xb0] sm:$0xff]
    %v1587 = vld [vmem:[#allocation2 + $0xb8] sm:$0xff]
    %v1588 = vld [vmem:[#allocation2 + $0xc0] sm:$0xff]
    %v1589 = vld [vmem:[#allocation2 + $0xc8] sm:$0xff]
    %v1590 = vld [vmem:[#allocation2 + $0xd0] sm:$0xff]
    %v1591 = vld [vmem:[#allocation2 + $0xd8] sm:$0xff]
    %v1592 = vld [vmem:[#allocation2 + $0xe0] sm:$0xff]
    %v1593 = vld [vmem:[#allocation2 + $0xe8] sm:$0xff]
    %v1594 = vld [vmem:[#allocation2 + $0xf0] sm:$0xff]
    %v1595 = vld [vmem:[#allocation2 + $0xf8] sm:$0xff]
    %v1596 = vld [vmem:[#allocation2 + $0x100] sm:$0xff]
    %v1597 = vld [vmem:[#allocation2 + $0x108] sm:$0xff]
    %v1598 = vld [vmem:[#allocation2 + $0x110] sm:$0xff]
    %v1599 = vld [vmem:[#allocation2 + $0x118] sm:$0xff]
    %v1602 = vunpack.c.l.b16 %v1562
    %v1603 = vunpack.c.h.b16 %v1562
    %v1604 = vunpack.c.l.b16 %v1563
    %v1605 = vunpack.c.h.b16 %v1563
    %v1606 = vpack.c.b16 %v1604, %v1602
    %v1607 = vpack.c.b16 %v1605, %v1603
    %v1645 = vunpack.c.l.b16 %v1564
    %v1646 = vunpack.c.h.b16 %v1564
    %v1647 = vunpack.c.l.b16 %v1565
    %v1648 = vunpack.c.h.b16 %v1565
    %v1649 = vunpack.c.l.b16 %v1566
    %v1650 = vunpack.c.h.b16 %v1566
    %v1651 = vunpack.c.l.b16 %v1567
    %v1652 = vunpack.c.h.b16 %v1567
    %v1653 = vunpack.c.l.b16 %v1568
    %v1654 = vunpack.c.h.b16 %v1568
    %v1655 = vunpack.c.l.b16 %v1569
    %v1656 = vunpack.c.h.b16 %v1569
    %v1657 = vunpack.c.l.b16 %v1570
    %v1658 = vunpack.c.h.b16 %v1570
    %v1659 = vunpack.c.l.b16 %v1571
    %v1660 = vunpack.c.h.b16 %v1571
    %v1661 = vunpack.c.l.b16 %v1572
    %v1662 = vunpack.c.h.b16 %v1572
    %v1663 = vunpack.c.l.b16 %v1573
    %v1664 = vunpack.c.h.b16 %v1573
    %v1665 = vunpack.c.l.b16 %v1574
    %v1666 = vunpack.c.h.b16 %v1574
    %v1667 = vunpack.c.l.b16 %v1575
    %v1668 = vunpack.c.h.b16 %v1575
    %v1669 = vunpack.c.l.b16 %v1576
    %v1670 = vunpack.c.h.b16 %v1576
    %v1671 = vunpack.c.l.b16 %v1577
    %v1672 = vunpack.c.h.b16 %v1577
    %v1673 = vunpack.c.l.b16 %v1578
    %v1674 = vunpack.c.h.b16 %v1578
    %v1675 = vunpack.c.l.b16 %v1579
    %v1676 = vunpack.c.h.b16 %v1579
    %v1677 = vunpack.c.l.b16 %v1580
    %v1678 = vunpack.c.h.b16 %v1580
    %v1679 = vunpack.c.l.b16 %v1581
    %v1680 = vunpack.c.h.b16 %v1581
    %v1681 = vunpack.c.l.b16 %v1582
    %v1682 = vunpack.c.h.b16 %v1582
    %v1683 = vunpack.c.l.b16 %v1583
    %v1684 = vunpack.c.h.b16 %v1583
    %v1685 = vunpack.c.l.b16 %v1584
    %v1686 = vunpack.c.h.b16 %v1584
    %v1687 = vunpack.c.l.b16 %v1585
    %v1688 = vunpack.c.h.b16 %v1585
    %v1689 = vunpack.c.l.b16 %v1586
    %v1690 = vunpack.c.h.b16 %v1586
    %v1691 = vunpack.c.l.b16 %v1587
    %v1692 = vunpack.c.h.b16 %v1587
    %v1693 = vunpack.c.l.b16 %v1588
    %v1694 = vunpack.c.h.b16 %v1588
    %v1695 = vunpack.c.l.b16 %v1589
    %v1696 = vunpack.c.h.b16 %v1589
    %v1697 = vunpack.c.l.b16 %v1590
    %v1698 = vunpack.c.h.b16 %v1590
    %v1699 = vunpack.c.l.b16 %v1591
    %v1700 = vunpack.c.h.b16 %v1591
    %v1701 = vunpack.c.l.b16 %v1592
    %v1702 = vunpack.c.h.b16 %v1592
    %v1703 = vunpack.c.l.b16 %v1593
    %v1704 = vunpack.c.h.b16 %v1593
    %v1705 = vunpack.c.l.b16 %v1594
    %v1706 = vunpack.c.h.b16 %v1594
    %v1707 = vunpack.c.l.b16 %v1595
    %v1708 = vunpack.c.h.b16 %v1595
    %v1709 = vunpack.c.l.b16 %v1596
    %v1710 = vunpack.c.h.b16 %v1596
    %v1711 = vunpack.c.l.b16 %v1597
    %v1712 = vunpack.c.h.b16 %v1597
    %v1713 = vunpack.c.l.b16 %v1598
    %v1714 = vunpack.c.h.b16 %v1598
    %v1715 = vunpack.c.l.b16 %v1599
    %v1716 = vunpack.c.h.b16 %v1599
    %v1717 = vpack.c.b16 %v1649, %v1645
    %v1718 = vpack.c.b16 %v1650, %v1646
    %v1719 = vpack.c.b16 %v1651, %v1647
    %v1720 = vpack.c.b16 %v1652, %v1648
    %v1721 = vpack.c.b16 %v1657, %v1653
    %v1722 = vpack.c.b16 %v1658, %v1654
    %v1723 = vpack.c.b16 %v1659, %v1655
    %v1724 = vpack.c.b16 %v1660, %v1656
    %v1725 = vpack.c.b16 %v1665, %v1661
    %v1726 = vpack.c.b16 %v1666, %v1662
    %v1727 = vpack.c.b16 %v1667, %v1663
    %v1728 = vpack.c.b16 %v1668, %v1664
    %v1729 = vpack.c.b16 %v1673, %v1669
    %v1730 = vpack.c.b16 %v1674, %v1670
    %v1731 = vpack.c.b16 %v1675, %v1671
    %v1732 = vpack.c.b16 %v1676, %v1672
    %v1733 = vpack.c.b16 %v1681, %v1677
    %v1734 = vpack.c.b16 %v1682, %v1678
    %v1735 = vpack.c.b16 %v1683, %v1679
    %v1736 = vpack.c.b16 %v1684, %v1680
    %v1737 = vpack.c.b16 %v1689, %v1685
    %v1738 = vpack.c.b16 %v1690, %v1686
    %v1739 = vpack.c.b16 %v1691, %v1687
    %v1740 = vpack.c.b16 %v1692, %v1688
    %v1741 = vpack.c.b16 %v1697, %v1693
    %v1742 = vpack.c.b16 %v1698, %v1694
    %v1743 = vpack.c.b16 %v1699, %v1695
    %v1744 = vpack.c.b16 %v1700, %v1696
    %v1745 = vpack.c.b16 %v1705, %v1701
    %v1746 = vpack.c.b16 %v1706, %v1702
    %v1747 = vpack.c.b16 %v1707, %v1703
    %v1748 = vpack.c.b16 %v1708, %v1704
    %v1749 = vpack.c.b16 %v1713, %v1709
    %v1750 = vpack.c.b16 %v1714, %v1710
    %v1751 = vpack.c.b16 %v1715, %v1711
    %v1752 = vpack.c.b16 %v1716, %v1712
    %v1790 = vsel %vm778, %v1607, 0
    %1792 = vmatpush.bf16.msra.mxu0 %v1745
    %1793 = vmatpush.bf16.msra.mxu0 %v1741
    %1794 = vmatpush.bf16.msra.mxu0 %v1737
    %1795 = vmatpush.bf16.msra.mxu0 %v1733
    %1796 = vmatpush.bf16.msra.mxu0 %v1729
    %1797 = vmatpush.bf16.msra.mxu0 %v1725
    %1798 = vmatpush.bf16.msra.mxu0 %v1721
    %1799 = vmatpush.bf16.msra.mxu0 %v1717
    %1800 = vmatmul.bf16.gmra.mxu0 %v1606
    %v1801 = vpop.f32.mrf.mxu0
    %v1802 = vadd.f32 0.0, %v1801
    %v1803 = vpop.f32.mrf.mxu0
    %v1804 = vadd.f32 0.0, %v1803
    %1805 = vdwg.mxu0
    %1806 = vmatpush.bf16.msra.mxu0 0
    %1807 = vmatpush.bf16.msra.mxu0 0
    %1808 = vmatpush.bf16.msra.mxu0 0
    %1809 = vmatpush.bf16.msra.mxu0 0
    %1810 = vmatpush.bf16.msra.mxu0 0
    %1811 = vmatpush.bf16.msra.mxu0 0
    %1812 = vmatpush.bf16.msra.mxu0 0
    %1813 = vmatpush.bf16.msra.mxu0 %v1749
    %1814 = vmatmul.bf16.gmra.mxu0 %v1790
    %v1815 = vpop.f32.mrf.mxu0
    %v1816 = vadd.f32 %v1802, %v1815
    %v1817 = vpop.f32.mrf.mxu0
    %v1818 = vadd.f32 %v1804, %v1817
    %1819 = vdwg.mxu0
    %1820 = vmatpush.bf16.msra.mxu0 %v1746
    %1821 = vmatpush.bf16.msra.mxu0 %v1742
    %1822 = vmatpush.bf16.msra.mxu0 %v1738
    %1823 = vmatpush.bf16.msra.mxu0 %v1734
    %1824 = vmatpush.bf16.msra.mxu0 %v1730
    %1825 = vmatpush.bf16.msra.mxu0 %v1726
    %1826 = vmatpush.bf16.msra.mxu0 %v1722
    %1827 = vmatpush.bf16.msra.mxu0 %v1718
    %1828 = vmatmul.bf16.gmra.mxu0 %v1606
    %v1829 = vpop.f32.mrf.mxu0
    %v1830 = vadd.f32 0.0, %v1829
    %v1831 = vpop.f32.mrf.mxu0
    %v1832 = vadd.f32 0.0, %v1831
    %1833 = vdwg.mxu0
    %1834 = vmatpush.bf16.msra.mxu0 0
    %1835 = vmatpush.bf16.msra.mxu0 0
    %1836 = vmatpush.bf16.msra.mxu0 0
    %1837 = vmatpush.bf16.msra.mxu0 0
    %1838 = vmatpush.bf16.msra.mxu0 0
    %1839 = vmatpush.bf16.msra.mxu0 0
    %1840 = vmatpush.bf16.msra.mxu0 0
    %1841 = vmatpush.bf16.msra.mxu0 %v1750
    %1842 = vmatmul.bf16.gmra.mxu0 %v1790
    %v1843 = vpop.f32.mrf.mxu0
    %v1844 = vadd.f32 %v1830, %v1843
    %v1845 = vpop.f32.mrf.mxu0
    %v1846 = vadd.f32 %v1832, %v1845
    %1847 = vdwg.mxu0
    %1848 = vmatpush.bf16.msra.mxu0 %v1747
    %1849 = vmatpush.bf16.msra.mxu0 %v1743
    %1850 = vmatpush.bf16.msra.mxu0 %v1739
    %1851 = vmatpush.bf16.msra.mxu0 %v1735
    %1852 = vmatpush.bf16.msra.mxu0 %v1731
    %1853 = vmatpush.bf16.msra.mxu0 %v1727
    %1854 = vmatpush.bf16.msra.mxu0 %v1723
    %1855 = vmatpush.bf16.msra.mxu0 %v1719
    %1856 = vmatmul.bf16.gmra.mxu0 %v1606
    %v1857 = vpop.f32.mrf.mxu0
    %v1858 = vadd.f32 0.0, %v1857
    %v1859 = vpop.f32.mrf.mxu0
    %v1860 = vadd.f32 0.0, %v1859
    %1861 = vdwg.mxu0
    %1862 = vmatpush.bf16.msra.mxu0 0
    %1863 = vmatpush.bf16.msra.mxu0 0
    %1864 = vmatpush.bf16.msra.mxu0 0
    %1865 = vmatpush.bf16.msra.mxu0 0
    %1866 = vmatpush.bf16.msra.mxu0 0
    %1867 = vmatpush.bf16.msra.mxu0 0
    %1868 = vmatpush.bf16.msra.mxu0 0
    %1869 = vmatpush.bf16.msra.mxu0 %v1751
    %1870 = vmatmul.bf16.gmra.mxu0 %v1790
    %v1871 = vpop.f32.mrf.mxu0
    %v1872 = vadd.f32 %v1858, %v1871
    %v1873 = vpop.f32.mrf.mxu0
    %v1874 = vadd.f32 %v1860, %v1873
    %1875 = vdwg.mxu0
    %1876 = vmatpush.bf16.msra.mxu0 %v1748
    %1877 = vmatpush.bf16.msra.mxu0 %v1744
    %1878 = vmatpush.bf16.msra.mxu0 %v1740
    %1879 = vmatpush.bf16.msra.mxu0 %v1736
    %1880 = vmatpush.bf16.msra.mxu0 %v1732
    %1881 = vmatpush.bf16.msra.mxu0 %v1728
    %1882 = vmatpush.bf16.msra.mxu0 %v1724
    %1883 = vmatpush.bf16.msra.mxu0 %v1720
    %1884 = vmatmul.bf16.gmra.mxu0 %v1606
    %v1885 = vpop.f32.mrf.mxu0
    %v1886 = vadd.f32 0.0, %v1885
    %v1887 = vpop.f32.mrf.mxu0
    %v1888 = vadd.f32 0.0, %v1887
    %1889 = vdwg.mxu0
    %1890 = vmatpush.bf16.msra.mxu0 0
    %1891 = vmatpush.bf16.msra.mxu0 0
    %1892 = vmatpush.bf16.msra.mxu0 0
    %1893 = vmatpush.bf16.msra.mxu0 0
    %1894 = vmatpush.bf16.msra.mxu0 0
    %1895 = vmatpush.bf16.msra.mxu0 0
    %1896 = vmatpush.bf16.msra.mxu0 0
    %1897 = vmatpush.bf16.msra.mxu0 %v1752
    %1898 = vmatmul.bf16.gmra.mxu0 %v1790
    %v1899 = vpop.f32.mrf.mxu0
    %v1900 = vadd.f32 %v1886, %v1899
    %v1901 = vpop.f32.mrf.mxu0
    %v1902 = vadd.f32 %v1888, %v1901
    %1903 = vdwg.mxu0
    %v1904 = vld [vmem:[%s7] sm:$0xff]
    %v1905 = vld [vmem:[%s7 + $0x8] sm:$0xff]
    %v1906 = vld [vmem:[%s8] sm:$0xff]
    %v1907 = vld [vmem:[%s8 + $0x8] sm:$0xff]
    %1908 = vmatpush.msra.mxu0 %v96
    %1909 = vmatpush.msra.mxu0 %v95
    %1910 = vmatpush.msra.mxu0 %v94
    %1911 = vmatpush.msra.mxu0 %v93
    %1912 = vmatpush.msra.mxu0 %v92
    %1913 = vmatpush.msra.mxu0 %v91
    %1914 = vmatpush.msra.mxu0 %v90
    %1915 = vmatpush.msra.mxu0 %v89
    %1916 = vmatpush.msra.mxu0 %v88
    %1917 = vmatpush.msra.mxu0 %v87
    %1918 = vmatpush.msra.mxu0 %v86
    %1919 = vmatpush.msra.mxu0 %v85
    %1920 = vmatpush.msra.mxu0 %v84
    %1921 = vmatpush.msra.mxu0 %v83
    %1922 = vmatpush.msra.mxu0 %v82
    %1923 = vmatpush.msra.mxu0 %v81
    %1924 = vmatmul.f32.gmra.mxu0 %v1816
    %v1925 = vpop.f32.mrf.mxu0
    %v1926 = vadd.f32 0.0, %v1925
    %1927 = vmatmul.f32.gmra.mxu0 %v1818
    %v1928 = vpop.f32.mrf.mxu0
    %v1929 = vadd.f32 0.0, %v1928
    %1930 = vdwg.mxu0
    %1931 = vmatpush.msra.mxu0 %v112
    %1932 = vmatpush.msra.mxu0 %v111
    %1933 = vmatpush.msra.mxu0 %v110
    %1934 = vmatpush.msra.mxu0 %v109
    %1935 = vmatpush.msra.mxu0 %v108
    %1936 = vmatpush.msra.mxu0 %v107
    %1937 = vmatpush.msra.mxu0 %v106
    %1938 = vmatpush.msra.mxu0 %v105
    %1939 = vmatpush.msra.mxu0 %v104
    %1940 = vmatpush.msra.mxu0 %v103
    %1941 = vmatpush.msra.mxu0 %v102
    %1942 = vmatpush.msra.mxu0 %v101
    %1943 = vmatpush.msra.mxu0 %v100
    %1944 = vmatpush.msra.mxu0 %v99
    %1945 = vmatpush.msra.mxu0 %v98
    %1946 = vmatpush.msra.mxu0 %v97
    %1947 = vmatmul.f32.gmra.mxu0 %v1844
    %v1948 = vpop.f32.mrf.mxu0
    %v1949 = vadd.f32 %v1926, %v1948
    %1950 = vmatmul.f32.gmra.mxu0 %v1846
    %v1951 = vpop.f32.mrf.mxu0
    %v1952 = vadd.f32 %v1929, %v1951
    %1953 = vdwg.mxu0
    %1954 = vmatpush.msra.mxu0 %v128
    %1955 = vmatpush.msra.mxu0 %v127
    %1956 = vmatpush.msra.mxu0 %v126
    %1957 = vmatpush.msra.mxu0 %v125
    %1958 = vmatpush.msra.mxu0 %v124
    %1959 = vmatpush.msra.mxu0 %v123
    %1960 = vmatpush.msra.mxu0 %v122
    %1961 = vmatpush.msra.mxu0 %v121
    %1962 = vmatpush.msra.mxu0 %v120
    %1963 = vmatpush.msra.mxu0 %v119
    %1964 = vmatpush.msra.mxu0 %v118
    %1965 = vmatpush.msra.mxu0 %v117
    %1966 = vmatpush.msra.mxu0 %v116
    %1967 = vmatpush.msra.mxu0 %v115
    %1968 = vmatpush.msra.mxu0 %v114
    %1969 = vmatpush.msra.mxu0 %v113
    %1970 = vmatmul.f32.gmra.mxu0 %v1872
    %v1971 = vpop.f32.mrf.mxu0
    %v1972 = vadd.f32 %v1949, %v1971
    %1973 = vmatmul.f32.gmra.mxu0 %v1874
    %v1974 = vpop.f32.mrf.mxu0
    %v1975 = vadd.f32 %v1952, %v1974
    %1976 = vdwg.mxu0
    %1977 = vmatpush.msra.mxu0 %v144
    %1978 = vmatpush.msra.mxu0 %v143
    %1979 = vmatpush.msra.mxu0 %v142
    %1980 = vmatpush.msra.mxu0 %v141
    %1981 = vmatpush.msra.mxu0 %v140
    %1982 = vmatpush.msra.mxu0 %v139
    %1983 = vmatpush.msra.mxu0 %v138
    %1984 = vmatpush.msra.mxu0 %v137
    %1985 = vmatpush.msra.mxu0 %v136
    %1986 = vmatpush.msra.mxu0 %v135
    %1987 = vmatpush.msra.mxu0 %v134
    %1988 = vmatpush.msra.mxu0 %v133
    %1989 = vmatpush.msra.mxu0 %v132
    %1990 = vmatpush.msra.mxu0 %v131
    %1991 = vmatpush.msra.mxu0 %v130
    %1992 = vmatpush.msra.mxu0 %v129
    %1993 = vmatmul.f32.gmra.mxu0 %v1900
    %v1994 = vpop.f32.mrf.mxu0
    %v1995 = vadd.f32 %v1972, %v1994
    %1996 = vmatmul.f32.gmra.mxu0 %v1902
    %v1997 = vpop.f32.mrf.mxu0
    %v1998 = vadd.f32 %v1975, %v1997
    %1999 = vdwg.mxu0
    %v2000 = vmul.f32 %v1816, %v1816
    %v2001 = vmul.f32 %v1844, %v1844
    %v2002 = vmul.f32 %v1872, %v1872
    %v2003 = vmul.f32 %v1900, %v1900
    %v2004 = vmul.f32 %v1818, %v1818
    %v2005 = vmul.f32 %v1846, %v1846
    %v2006 = vmul.f32 %v1874, %v1874
    %v2007 = vmul.f32 %v1902, %v1902
    %2008 = vmatpush.msra.mxu0 %v96
    %2009 = vmatpush.msra.mxu0 %v95
    %2010 = vmatpush.msra.mxu0 %v94
    %2011 = vmatpush.msra.mxu0 %v93
    %2012 = vmatpush.msra.mxu0 %v92
    %2013 = vmatpush.msra.mxu0 %v91
    %2014 = vmatpush.msra.mxu0 %v90
    %2015 = vmatpush.msra.mxu0 %v89
    %2016 = vmatpush.msra.mxu0 %v88
    %2017 = vmatpush.msra.mxu0 %v87
    %2018 = vmatpush.msra.mxu0 %v86
    %2019 = vmatpush.msra.mxu0 %v85
    %2020 = vmatpush.msra.mxu0 %v84
    %2021 = vmatpush.msra.mxu0 %v83
    %2022 = vmatpush.msra.mxu0 %v82
    %2023 = vmatpush.msra.mxu0 %v81
    %2024 = vmatmul.f32.gmra.mxu0 %v2000
    %v2025 = vpop.f32.mrf.mxu0
    %v2026 = vadd.f32 0.0, %v2025
    %2027 = vmatmul.f32.gmra.mxu0 %v2004
    %v2028 = vpop.f32.mrf.mxu0
    %v2029 = vadd.f32 0.0, %v2028
    %2030 = vdwg.mxu0
    %2031 = vmatpush.msra.mxu0 %v112
    %2032 = vmatpush.msra.mxu0 %v111
    %2033 = vmatpush.msra.mxu0 %v110
    %2034 = vmatpush.msra.mxu0 %v109
    %2035 = vmatpush.msra.mxu0 %v108
    %2036 = vmatpush.msra.mxu0 %v107
    %2037 = vmatpush.msra.mxu0 %v106
    %2038 = vmatpush.msra.mxu0 %v105
    %2039 = vmatpush.msra.mxu0 %v104
    %2040 = vmatpush.msra.mxu0 %v103
    %2041 = vmatpush.msra.mxu0 %v102
    %2042 = vmatpush.msra.mxu0 %v101
    %2043 = vmatpush.msra.mxu0 %v100
    %2044 = vmatpush.msra.mxu0 %v99
    %2045 = vmatpush.msra.mxu0 %v98
    %2046 = vmatpush.msra.mxu0 %v97
    %2047 = vmatmul.f32.gmra.mxu0 %v2001
    %v2048 = vpop.f32.mrf.mxu0
    %v2049 = vadd.f32 %v2026, %v2048
    %2050 = vmatmul.f32.gmra.mxu0 %v2005
    %v2051 = vpop.f32.mrf.mxu0
    %v2052 = vadd.f32 %v2029, %v2051
    %2053 = vdwg.mxu0
    %2054 = vmatpush.msra.mxu0 %v128
    %2055 = vmatpush.msra.mxu0 %v127
    %2056 = vmatpush.msra.mxu0 %v126
    %2057 = vmatpush.msra.mxu0 %v125
    %2058 = vmatpush.msra.mxu0 %v124
    %2059 = vmatpush.msra.mxu0 %v123
    %2060 = vmatpush.msra.mxu0 %v122
    %2061 = vmatpush.msra.mxu0 %v121
    %2062 = vmatpush.msra.mxu0 %v120
    %2063 = vmatpush.msra.mxu0 %v119
    %2064 = vmatpush.msra.mxu0 %v118
    %2065 = vmatpush.msra.mxu0 %v117
    %2066 = vmatpush.msra.mxu0 %v116
    %2067 = vmatpush.msra.mxu0 %v115
    %2068 = vmatpush.msra.mxu0 %v114
    %2069 = vmatpush.msra.mxu0 %v113
    %2070 = vmatmul.f32.gmra.mxu0 %v2002
    %v2071 = vpop.f32.mrf.mxu0
    %v2072 = vadd.f32 %v2049, %v2071
    %2073 = vmatmul.f32.gmra.mxu0 %v2006
    %v2074 = vpop.f32.mrf.mxu0
    %v2075 = vadd.f32 %v2052, %v2074
    %2076 = vdwg.mxu0
    %2077 = vmatpush.msra.mxu0 %v144
    %2078 = vmatpush.msra.mxu0 %v143
    %2079 = vmatpush.msra.mxu0 %v142
    %2080 = vmatpush.msra.mxu0 %v141
    %2081 = vmatpush.msra.mxu0 %v140
    %2082 = vmatpush.msra.mxu0 %v139
    %2083 = vmatpush.msra.mxu0 %v138
    %2084 = vmatpush.msra.mxu0 %v137
    %2085 = vmatpush.msra.mxu0 %v136
    %2086 = vmatpush.msra.mxu0 %v135
    %2087 = vmatpush.msra.mxu0 %v134
    %2088 = vmatpush.msra.mxu0 %v133
    %2089 = vmatpush.msra.mxu0 %v132
    %2090 = vmatpush.msra.mxu0 %v131
    %2091 = vmatpush.msra.mxu0 %v130
    %2092 = vmatpush.msra.mxu0 %v129
    %2093 = vmatmul.f32.gmra.mxu0 %v2003
    %v2094 = vpop.f32.mrf.mxu0
    %v2095 = vadd.f32 %v2072, %v2094
    %2096 = vmatmul.f32.gmra.mxu0 %v2007
    %v2097 = vpop.f32.mrf.mxu0
    %v2098 = vadd.f32 %v2075, %v2097
    %2099 = vdwg.mxu0
    %v2100 = vmul.f32 %v1995, 0.001953125
    %v2101 = vmul.f32 %v1998, 0.001953125
    %v2102 = vmul.f32 %v2095, 0.001953125
    %v2103 = vmul.f32 %v2098, 0.001953125
    %v2104 = vmul.f32 %v2100, %v2100
    %v2105 = vmul.f32 %v2101, %v2101
    %v2106 = vsub.f32 %v2102, %v2104
    %v2107 = vsub.f32 %v2103, %v2105
    %v2108 = vadd.f32 %v2106, 1e-05
    %v2109 = vadd.f32 %v2107, 1e-05
    %v2110 = vrsqrt.pop %v2108
    %v2111 = vmul.f32 %v2110, %v2108
    %v2112 = vmul.f32 %v2111, %v2110
    %v2113 = vmul.f32 0.5, %v2112
    %v2114 = vsub.f32 1.5, %v2113
    %v2115 = vmul.f32 %v2110, %v2114
    %vm2116 = vweird.f32 %v2108
    %vm2117 = vweird.f32 %v2110
    %vm2118 = vmor %vm2116, %vm2117
    %v2119 = vsel %vm2118, %v2110, %v2115
    %v2120 = vrsqrt.pop %v2109
    %v2121 = vmul.f32 %v2120, %v2109
    %v2122 = vmul.f32 %v2121, %v2120
    %v2123 = vmul.f32 0.5, %v2122
    %v2124 = vsub.f32 1.5, %v2123
    %v2125 = vmul.f32 %v2120, %v2124
    %vm2126 = vweird.f32 %v2109
    %vm2127 = vweird.f32 %v2120
    %vm2128 = vmor %vm2126, %vm2127
    %v2129 = vsel %vm2128, %v2120, %v2125
    %v2130 = vmul.f32 %v1904, %v2119
    %v2131 = vmul.f32 %v1905, %v2129
    %2133 = vset.pattern.permute.xlu0 0
    %2134 = vperm.xlu0 %2133, %v2130
    %v2135 = vpop.permute.xlu0 %2134
    %2138 = vset.pattern.permute.xlu0 0
    %2139 = vperm.xlu0 %2138, %v2131
    %v2140 = vpop.permute.xlu0 %2139
    %v2142 = vmul.f32 %v1816, %v2135
    %v2143 = vmul.f32 %v1844, %v2135
    %v2144 = vmul.f32 %v1872, %v2135
    %v2145 = vmul.f32 %v1900, %v2135
    %v2146 = vmul.f32 %v1818, %v2140
    %v2147 = vmul.f32 %v1846, %v2140
    %v2148 = vmul.f32 %v1874, %v2140
    %v2149 = vmul.f32 %v1902, %v2140
    %v2150 = vmul.f32 %v2100, %v2130
    %v2151 = vmul.f32 %v2101, %v2131
    %v2152 = vsub.f32 %v1906, %v2150
    %v2153 = vsub.f32 %v1907, %v2151
    %2155 = vset.pattern.permute.xlu0 0
    %2156 = vperm.xlu0 %2155, %v2152
    %v2157 = vpop.permute.xlu0 %2156
    %2160 = vset.pattern.permute.xlu0 0
    %2161 = vperm.xlu0 %2160, %v2153
    %v2162 = vpop.permute.xlu0 %2161
    %v2164 = vadd.f32 %v2142, %v2157
    %v2165 = vadd.f32 %v2143, %v2157
    %v2166 = vadd.f32 %v2144, %v2157
    %v2167 = vadd.f32 %v2145, %v2157
    %v2168 = vadd.f32 %v2146, %v2162
    %v2169 = vadd.f32 %v2147, %v2162
    %v2170 = vadd.f32 %v2148, %v2162
    %v2171 = vadd.f32 %v2149, %v2162
    %v2172 = vadd.f32 %v2164, %v145
    %v2173 = vadd.f32 %v2165, %v146
    %v2174 = vadd.f32 %v2166, %v147
    %v2175 = vadd.f32 %v2167, %v148
    %v2176 = vadd.f32 %v2168, %v149
    %v2177 = vadd.f32 %v2169, %v150
    %v2178 = vadd.f32 %v2170, %v151
    %v2179 = vadd.f32 %v2171, %v152
    %v2180 = vmax.f32 %v2172, 0.0
    %v2181 = vmax.f32 %v2173, 0.0
    %v2182 = vmax.f32 %v2174, 0.0
    %v2183 = vmax.f32 %v2175, 0.0
    %v2184 = vmax.f32 %v2176, 0.0
    %v2185 = vmax.f32 %v2177, 0.0
    %v2186 = vmax.f32 %v2178, 0.0
    %v2187 = vmax.f32 %v2179, 0.0
    %2188 = vst [vmem:[#allocation9] sm:$0xff] %v2180
    %2189 = vst [vmem:[#allocation9 + $0x8] sm:$0xff] %v2181
    %2190 = vst [vmem:[#allocation9 + $0x10] sm:$0xff] %v2182
    %2191 = vst [vmem:[#allocation9 + $0x18] sm:$0xff] %v2183
    %2192 = vst [vmem:[#allocation9 + $0x20] sm:$0xff] %v2184
    %2193 = vst [vmem:[#allocation9 + $0x28] sm:$0xff] %v2185
    %2194 = vst [vmem:[#allocation9 + $0x30] sm:$0xff] %v2186
    %2195 = vst [vmem:[#allocation9 + $0x38] sm:$0xff] %v2187
    // Predicated region
    $region50: #{tpu_custom_call.1} parent=1 // pred_check
      _
    $region51: #{tpu_custom_call.1} parent=1 // pred_check_branch
      %2197 = sbr.rel (0) target = $region53
    $region52: #{tpu_custom_call.1} parent=1 // pred_region
      %2199 = vsyncadd [#allocation5], 0
      %s2200 = sshll.u32 [#allocation9], 4
      %s2201 = int_to_ptr.vmem [resolvable:$true] %s2200
      %s2202 = sshll.u32 %s9, 4
      %s2203 = int_to_ptr.hbm [resolvable:$true] %s2202
      %2208 = dma.vmem_to_hbm [thread:$0]  %s2201, 1024, %s2203, [#allocation5], 512, 512, 32
    $region53: #{tpu_custom_call.1} parent=1 // pred_fallthru
      _
    // Predicated region
    $region54: #{tpu_custom_call.1} parent=1 // pred_check
      _
    $region55: #{tpu_custom_call.1} parent=1 // pred_check_branch
      %2210 = sbr.rel (0) target = $region57
    $region56: #{tpu_custom_call.1} parent=1 // pred_region
      %2212 = dma.done [#allocation5], 1024
    $region57: #{tpu_custom_call.1} parent=1 // pred_fallthru
      _
    %2213 = vsyncpa [#allocation4], 1
    %2214 = vsyncpa [#allocation7], 1
    %2215 = vsyncpa [#allocation5], 1

</llo_original>
